<compile_context>
chip_gen: v7x
topology: tpu7x:2x2x1
jax: 0.10.0
libtpu: 0.0.40
codegen_flags: <defaults>
</compile_context>

<pallas_src>
import functools

import jax
import jax.numpy as jnp
from jax.experimental import pallas as pl
from jax.experimental.pallas import tpu as pltpu

VMEM = pltpu.MemorySpace.VMEM


def _round_up(x, m):
    return ((x + m - 1) // m) * m


def _pad2(x, rows, cols, value=0.0):
    return jnp.pad(x, ((0, rows - x.shape[0]), (0, cols - x.shape[1])),
                   constant_values=value)


# packed small-operand buffer row layout (see ConcateNetPallas.__init__)
_ROW_B1, _ROW_B2, _ROW_TX, _ROW_TY, _ROW_INV2S2, _ROW_BFC = range(6)
_SMALL_ROWS = 8  # sublane-aligned


# ------------------------ fused ConcateNet forward kernel ---------------------
def concatenet_kernel(a_ref, xw1_ref, w2_ref, pool_ref, d_ref, seg_ref,
                      wfc_g_ref, wfc_p_ref, small_ref, out_ref,
                      *, q_pad, c_pad):
    f32 = jnp.float32
    bf16 = jnp.bfloat16

    # unpack the consolidated small-operand buffer (all f32 row vectors)
    sv = small_ref[...]                                    # [8, SW] f32
    b1 = sv[_ROW_B1:_ROW_B1 + 1, 0:128]                    # [1, 128]
    b2 = sv[_ROW_B2:_ROW_B2 + 1, 0:512]                    # [1, 512]
    tx = sv[_ROW_TX:_ROW_TX + 1, 0:q_pad]                  # [1, Q_pad]
    ty = sv[_ROW_TY:_ROW_TY + 1, 0:q_pad]                  # [1, Q_pad]
    inv2s2 = sv[_ROW_INV2S2:_ROW_INV2S2 + 1, 0:q_pad]      # [1, Q_pad]
    bfc = sv[_ROW_BFC:_ROW_BFC + 1, 0:c_pad]               # [1, C_pad]

    # ---- GNN branch (ManEmbedder-style).  X @ W1 was hoisted to the wrapper
    # at the true K = n_node_features, so the kernel starts at the A matmuls.
    a = a_ref[...]                                         # [N, N] bf16
    h1 = jnp.maximum(
        jnp.dot(a, xw1_ref[...], preferred_element_type=f32) + b1, 0.0)
    # reassociated layer 2: (A @ H1) @ W2 keeps the NxN contraction 128-wide
    ah1 = jnp.dot(a, h1.astype(bf16), preferred_element_type=f32)
    h2 = jnp.maximum(
        jnp.dot(ah1.astype(bf16), w2_ref[...], preferred_element_type=f32)
        + b2, 0.0)                                         # [N, 512] f32
    # exact 0/1 one-hot pooling on the MXU; mean scale applied in f32 (VPU)
    pool01 = pool_ref[...]                                 # [B, N] bf16 (0/1)
    x_gnn = jnp.dot(pool01, h2.astype(bf16), preferred_element_type=f32)
    counts = jnp.sum(pool01.astype(f32), axis=1, keepdims=True)   # [B, 1] f32
    x_gnn = x_gnn / jnp.maximum(counts, 1.0)               # [B, 512] f32

    # ---- PersLay branch entirely on VPU/EUP (no zero-padded-K MXU pass):
    # dist2 = (dx - tx)^2 + (dy - ty)^2, nonnegative by construction.
    d = d_ref[...]                                         # [P, 128] f32
    dx = d[:, 0:1]                                         # [P, 1]
    dy = d[:, 1:2]                                         # [P, 1]
    fx = dx - tx                                           # [P, Q_pad]
    fy = dy - ty
    dist2 = fx * fx + fy * fy                              # [P, Q_pad] f32
    phi = jnp.exp(-dist2 * inv2s2)                         # EUP, f32
    # segment-sum over diagram points per sample: [B, P] @ [P, Q] -> [B, Q]
    x_pl = jnp.dot(seg_ref[...], phi.astype(bf16), preferred_element_type=f32)

    # ---- head: concat-FC (branch weights pre-folded into Wfc) + log_softmax
    logits = (jnp.dot(x_gnn.astype(bf16), wfc_g_ref[...],
                      preferred_element_type=f32)
              + jnp.dot(x_pl.astype(bf16), wfc_p_ref[...],
                        preferred_element_type=f32)
              + bfc)                                       # [B, C_pad] f32
    m = jnp.max(logits, axis=1, keepdims=True)
    z = logits - m
    lse = jnp.log(jnp.sum(jnp.exp(z), axis=1, keepdims=True))
    out_ref[...] = z - lse


def concatenet_forward(a, xw1, w2, pool01, d, seg01, wfc_g, wfc_p, small,
                       *, q_pad, c_pad):
    inputs = (a, xw1, w2, pool01, d, seg01, wfc_g, wfc_p, small)
    b_pad, c_pad_full = pool01.shape[0], wfc_g.shape[1]
    out_shape = jax.ShapeDtypeStruct((b_pad, c_pad_full), jnp.float32)

    # right-sized VMEM request: operand + output footprint, 4x margin for
    # in-kernel intermediates / double-buffering, clamped to 8..16 MiB
    # (v7x has only 64 MiB physical VMEM per TC -- never ask for all of it).
    footprint = sum(int(x.size) * x.dtype.itemsize for x in inputs)
    footprint += b_pad * c_pad_full * 4
    vmem_limit = int(min(16 * 2**20, max(8 * 2**20, 4 * footprint)))

    kernel = functools.partial(concatenet_kernel, q_pad=q_pad, c_pad=c_pad)
    return pl.pallas_call(
        kernel,
        out_shape=out_shape,
        in_specs=[pl.BlockSpec(memory_space=VMEM)] * len(inputs),
        out_specs=pl.BlockSpec(memory_space=VMEM),
        compiler_params=pltpu.CompilerParams(vmem_limit_bytes=vmem_limit),
    )(*inputs)


# ------------------------------ full ConcateNet --------------------------------
class ConcateNetPallas:
    def __init__(self, n_node_features, n_classes, n_features_perslay, key):
        ks = jax.random.split(key, 7)
        F, C, Q = n_node_features, n_classes, n_features_perslay
        self.F, self.C, self.Q = F, C, Q
        self.C_pad = _round_up(C, 128)
        self.Q_pad = _round_up(Q, 128)

        # GNN embedder parameters: F -> 128 -> 512.  W1 is applied in the
        # wrapper (true K=F), so it stays unpadded f32.
        self.w1 = jax.random.normal(ks[0], (F, 128), jnp.float32) * 0.1
        b1 = jax.random.normal(ks[6], (128,), jnp.float32) * 0.01
        self.w2 = (jax.random.normal(ks[1], (128, 512), jnp.float32)
                   * 0.05).astype(jnp.bfloat16)
        b2 = jax.random.normal(ks[5], (512,), jnp.float32) * 0.01

        # PersLay parameters (Gaussian point transformer)
        t = jax.random.uniform(ks[2], (Q, 2), jnp.float32)          # targets
        sigma = 0.2 + 0.1 * jax.random.uniform(ks[3], (Q,), jnp.float32)
        inv2s2 = 1.0 / (2.0 * sigma * sigma)

        # branch weights (both init to 1.0) folded into the fc weight halves
        weight_gnn = jnp.float32(1.0)
        weight_perslay = jnp.float32(1.0)
        wfc = jax.random.normal(ks[4], (512 + Q, C), jnp.float32) * 0.05
        self.wfc_g = _pad2(weight_gnn * wfc[:512, :],
                           512, self.C_pad).astype(jnp.bfloat16)
        # padded rows/cols are exactly zero so padded phi columns / classes
        # cannot leak into real logits
        self.wfc_p = _pad2(weight_perslay * wfc[512:, :],
                           self.Q_pad, self.C_pad).astype(jnp.bfloat16)
        bfc = jax.random.normal(ks[5], (C,), jnp.float32) * 0.01

        # consolidated small-operand buffer: one DMA instead of six
        sw = max(512, self.Q_pad, self.C_pad)
        small = jnp.zeros((_SMALL_ROWS, sw), jnp.float32)
        small = small.at[_ROW_B1, :128].set(b1)
        small = small.at[_ROW_B2, :512].set(b2)
        small = small.at[_ROW_TX, :Q].set(t[:, 0])
        small = small.at[_ROW_TY, :Q].set(t[:, 1])
        small = small.at[_ROW_INV2S2, :Q].set(inv2s2)
        small = small.at[_ROW_INV2S2, Q:self.Q_pad].set(1.0)
        small = small.at[_ROW_BFC, :C].set(bfc)
        # padded classes get -1e9 so the log_softmax normalization is unchanged
        small = small.at[_ROW_BFC, C:self.C_pad].set(-1e9)
        self.small = small

    def __call__(self, adj_norm, node_x, node_batch, diagrams, point_index,
                 n_graphs):
        N = node_x.shape[0]
        P = diagrams.shape[0]
        B = n_graphs
        N_pad = _round_up(N, 128)
        P_pad = _round_up(P, 128)
        B_pad = _round_up(B, 16)

        # hoisted first GNN matmul at true K = n_node_features (plain XLA)
        xw1 = node_x @ self.w1                               # [N, 128] f32
        xw1 = _pad2(xw1, N_pad, 128).astype(jnp.bfloat16)

        a = _pad2(adj_norm, N_pad, N_pad).astype(jnp.bfloat16)

        # exact 0/1 one-hot segment maps (bf16-exact MXU operands)
        pool01 = (node_batch[None, :] == jnp.arange(B)[:, None]).astype(
            jnp.float32)
        pool01 = _pad2(pool01, B_pad, N_pad).astype(jnp.bfloat16)
        seg01 = (point_index[None, :] == jnp.arange(B)[:, None]).astype(
            jnp.float32)
        seg01 = _pad2(seg01, B_pad, P_pad).astype(jnp.bfloat16)

        d = _pad2(diagrams, P_pad, 128)          # f32, coords in cols 0:2

        out = concatenet_forward(a, xw1, self.w2, pool01, d, seg01,
                                 self.wfc_g, self.wfc_p, self.small,
                                 q_pad=self.Q_pad, c_pad=self.C_pad)
        return out[:B, :self.C]


if __name__ == "__main__":
    key = jax.random.PRNGKey(0)
    k_model, k_x, k_diag = jax.random.split(key, 3)

    # small synthetic batch consistent with the module's forward
    B = 2                     # graphs / samples in the batch
    F = 4                     # n_node_features
    C = 5                     # n_classes
    Q = 32                    # n_features_perslay
    nodes_per_graph = 8
    N = B * nodes_per_graph   # total graph nodes
    pts_per_diag = 6
    P = B * pts_per_diag      # total persistence-diagram points

    # graph data: chain graph per sample, symmetric normalized adjacency
    node_x = jax.random.normal(k_x, (N, F), jnp.float32)
    A = jnp.eye(N, dtype=jnp.float32)
    for b in range(B):
        off = b * nodes_per_graph
        for i in range(nodes_per_graph - 1):
            A = A.at[off + i, off + i + 1].set(1.0)
            A = A.at[off + i + 1, off + i].set(1.0)
    dinv = 1.0 / jnp.sqrt(A.sum(axis=1))
    adj_norm = A * dinv[:, None] * dinv[None, :]
    node_batch = jnp.repeat(jnp.arange(B), nodes_per_graph)     # [N]

    # persistence diagrams and their segmentation map
    diagrams = jax.random.uniform(k_diag, (P, 2), jnp.float32)
    point_index = jnp.repeat(jnp.arange(B), pts_per_diag)       # [P]

    model = ConcateNetPallas(F, C, Q, k_model)
    log_probs = model(adj_norm, node_x, node_batch, diagrams, point_index, B)
    log_probs = jax.block_until_ready(log_probs)

    assert log_probs.shape == (B, C)
    assert bool(jnp.all(jnp.isfinite(log_probs)))
    row_sums = jnp.exp(log_probs).sum(axis=1)            # must be ~1 per sample
    assert bool(jnp.all(jnp.abs(row_sums - 1.0) < 1e-3))
    print("KERNEL_OK")
</pallas_src>

<mosaic_0001>
module attributes {stable_mosaic.version = 11 : i64} {
  func.func @concatenet_kernel(%arg0: memref<128x128xbf16, #tpu.memory_space<vmem>>, %arg1: memref<128x128xbf16, #tpu.memory_space<vmem>>, %arg2: memref<128x512xbf16, #tpu.memory_space<vmem>>, %arg3: memref<16x128xbf16, #tpu.memory_space<vmem>>, %arg4: memref<128x128xf32, #tpu.memory_space<vmem>>, %arg5: memref<16x128xbf16, #tpu.memory_space<vmem>>, %arg6: memref<512x128xbf16, #tpu.memory_space<vmem>>, %arg7: memref<128x128xbf16, #tpu.memory_space<vmem>>, %arg8: memref<8x512xf32, #tpu.memory_space<vmem>>, %arg9: memref<16x128xf32, #tpu.memory_space<vmem>>) attributes {dimension_semantics = [], scalar_prefetch = 0 : i64, scratch_operands = 0 : i64, tpu.core_type = #tpu.core_type<tc>} {
    %c0 = arith.constant 0 : index
    %c0_0 = arith.constant 0 : index
    %0 = vector.load %arg8[%c0, %c0_0] : memref<8x512xf32, #tpu.memory_space<vmem>>, vector<8x512xf32>
    %1 = vector.extract_strided_slice %0 {offsets = [0, 0], sizes = [1, 128], strides = [1, 1]} : vector<8x512xf32> to vector<1x128xf32>
    %2 = vector.extract_strided_slice %0 {offsets = [1, 0], sizes = [1, 512], strides = [1, 1]} : vector<8x512xf32> to vector<1x512xf32>
    %3 = vector.extract_strided_slice %0 {offsets = [2, 0], sizes = [1, 128], strides = [1, 1]} : vector<8x512xf32> to vector<1x128xf32>
    %4 = vector.extract_strided_slice %0 {offsets = [3, 0], sizes = [1, 128], strides = [1, 1]} : vector<8x512xf32> to vector<1x128xf32>
    %5 = vector.extract_strided_slice %0 {offsets = [4, 0], sizes = [1, 128], strides = [1, 1]} : vector<8x512xf32> to vector<1x128xf32>
    %6 = vector.extract_strided_slice %0 {offsets = [5, 0], sizes = [1, 128], strides = [1, 1]} : vector<8x512xf32> to vector<1x128xf32>
    %c0_1 = arith.constant 0 : index
    %c0_2 = arith.constant 0 : index
    %7 = vector.load %arg0[%c0_1, %c0_2] : memref<128x128xbf16, #tpu.memory_space<vmem>>, vector<128x128xbf16>
    %c0_3 = arith.constant 0 : index
    %c0_4 = arith.constant 0 : index
    %8 = vector.load %arg1[%c0_3, %c0_4] : memref<128x128xbf16, #tpu.memory_space<vmem>>, vector<128x128xbf16>
    %cst = arith.constant dense<0.000000e+00> : vector<128x128xf32>
    %9 = tpu.matmul %7, %8, %cst {dimension_numbers = #tpu.dot_dimension_numbers<[1], [0], [0], [1], [0, 0, 1, 1], [], []>} : vector<128x128xbf16>, vector<128x128xbf16>, vector<128x128xf32> -> vector<128x128xf32>
    %10 = vector.broadcast %1 : vector<1x128xf32> to vector<128x128xf32>
    %11 = arith.addf %9, %10 : vector<128x128xf32>
    %cst_5 = arith.constant 0.000000e+00 : f32
    %12 = vector.broadcast %cst_5 : f32 to vector<128x128xf32>
    %13 = arith.maximumf %11, %12 : vector<128x128xf32>
    %14 = arith.truncf %13 : vector<128x128xf32> to vector<128x128xbf16>
    %cst_6 = arith.constant dense<0.000000e+00> : vector<128x128xf32>
    %15 = tpu.matmul %7, %14, %cst_6 {dimension_numbers = #tpu.dot_dimension_numbers<[1], [0], [0], [1], [0, 0, 1, 1], [], []>} : vector<128x128xbf16>, vector<128x128xbf16>, vector<128x128xf32> -> vector<128x128xf32>
    %16 = arith.truncf %15 : vector<128x128xf32> to vector<128x128xbf16>
    %c0_7 = arith.constant 0 : index
    %c0_8 = arith.constant 0 : index
    %17 = vector.load %arg2[%c0_7, %c0_8] : memref<128x512xbf16, #tpu.memory_space<vmem>>, vector<128x512xbf16>
    %cst_9 = arith.constant dense<0.000000e+00> : vector<128x512xf32>
    %18 = tpu.matmul %16, %17, %cst_9 {dimension_numbers = #tpu.dot_dimension_numbers<[1], [0], [0], [1], [0, 0, 1, 1], [], []>} : vector<128x128xbf16>, vector<128x512xbf16>, vector<128x512xf32> -> vector<128x512xf32>
    %19 = vector.broadcast %2 : vector<1x512xf32> to vector<128x512xf32>
    %20 = arith.addf %18, %19 : vector<128x512xf32>
    %cst_10 = arith.constant 0.000000e+00 : f32
    %21 = vector.broadcast %cst_10 : f32 to vector<128x512xf32>
    %22 = arith.maximumf %20, %21 : vector<128x512xf32>
    %c0_11 = arith.constant 0 : index
    %c0_12 = arith.constant 0 : index
    %23 = vector.load %arg3[%c0_11, %c0_12] : memref<16x128xbf16, #tpu.memory_space<vmem>>, vector<16x128xbf16>
    %24 = arith.truncf %22 : vector<128x512xf32> to vector<128x512xbf16>
    %cst_13 = arith.constant dense<0.000000e+00> : vector<16x512xf32>
    %25 = tpu.matmul %23, %24, %cst_13 {dimension_numbers = #tpu.dot_dimension_numbers<[1], [0], [0], [1], [0, 0, 1, 1], [], []>} : vector<16x128xbf16>, vector<128x512xbf16>, vector<16x512xf32> -> vector<16x512xf32>
    %26 = arith.extf %23 : vector<16x128xbf16> to vector<16x128xf32>
    %cst_14 = arith.constant dense<0.000000e+00> : vector<16xf32>
    %27 = vector.multi_reduction <add>, %26, %cst_14 [1] : vector<16x128xf32> to vector<16xf32>
    %28 = vector.shape_cast %27 : vector<16xf32> to vector<16x1xf32>
    %cst_15 = arith.constant 1.000000e+00 : f32
    %29 = vector.broadcast %cst_15 : f32 to vector<16x1xf32>
    %30 = arith.maximumf %28, %29 : vector<16x1xf32>
    %31 = vector.broadcast %30 : vector<16x1xf32> to vector<16x512xf32>
    %32 = arith.divf %25, %31 : vector<16x512xf32>
    %c0_16 = arith.constant 0 : index
    %c0_17 = arith.constant 0 : index
    %33 = vector.load %arg4[%c0_16, %c0_17] : memref<128x128xf32, #tpu.memory_space<vmem>>, vector<128x128xf32>
    %34 = vector.extract_strided_slice %33 {offsets = [0, 0], sizes = [128, 1], strides = [1, 1]} : vector<128x128xf32> to vector<128x1xf32>
    %35 = vector.extract_strided_slice %33 {offsets = [0, 1], sizes = [128, 1], strides = [1, 1]} : vector<128x128xf32> to vector<128x1xf32>
    %36 = vector.broadcast %34 : vector<128x1xf32> to vector<128x128xf32>
    %37 = vector.broadcast %3 : vector<1x128xf32> to vector<128x128xf32>
    %38 = arith.subf %36, %37 : vector<128x128xf32>
    %39 = vector.broadcast %35 : vector<128x1xf32> to vector<128x128xf32>
    %40 = vector.broadcast %4 : vector<1x128xf32> to vector<128x128xf32>
    %41 = arith.subf %39, %40 : vector<128x128xf32>
    %42 = arith.mulf %38, %38 : vector<128x128xf32>
    %43 = arith.mulf %41, %41 : vector<128x128xf32>
    %44 = arith.addf %42, %43 : vector<128x128xf32>
    %cst_18 = arith.constant 0.000000e+00 : f32
    %45 = vector.broadcast %cst_18 : f32 to vector<128x128xf32>
    %46 = arith.subf %45, %44 : vector<128x128xf32>
    %47 = vector.broadcast %5 : vector<1x128xf32> to vector<128x128xf32>
    %48 = arith.mulf %46, %47 : vector<128x128xf32>
    %49 = math.exp %48 : vector<128x128xf32>
    %c0_19 = arith.constant 0 : index
    %c0_20 = arith.constant 0 : index
    %50 = vector.load %arg5[%c0_19, %c0_20] : memref<16x128xbf16, #tpu.memory_space<vmem>>, vector<16x128xbf16>
    %51 = arith.truncf %49 : vector<128x128xf32> to vector<128x128xbf16>
    %cst_21 = arith.constant dense<0.000000e+00> : vector<16x128xf32>
    %52 = tpu.matmul %50, %51, %cst_21 {dimension_numbers = #tpu.dot_dimension_numbers<[1], [0], [0], [1], [0, 0, 1, 1], [], []>} : vector<16x128xbf16>, vector<128x128xbf16>, vector<16x128xf32> -> vector<16x128xf32>
    %53 = arith.truncf %32 : vector<16x512xf32> to vector<16x512xbf16>
    %c0_22 = arith.constant 0 : index
    %c0_23 = arith.constant 0 : index
    %54 = vector.load %arg6[%c0_22, %c0_23] : memref<512x128xbf16, #tpu.memory_space<vmem>>, vector<512x128xbf16>
    %cst_24 = arith.constant dense<0.000000e+00> : vector<16x128xf32>
    %55 = tpu.matmul %53, %54, %cst_24 {dimension_numbers = #tpu.dot_dimension_numbers<[1], [0], [0], [1], [0, 0, 1, 1], [], []>} : vector<16x512xbf16>, vector<512x128xbf16>, vector<16x128xf32> -> vector<16x128xf32>
    %56 = arith.truncf %52 : vector<16x128xf32> to vector<16x128xbf16>
    %c0_25 = arith.constant 0 : index
    %c0_26 = arith.constant 0 : index
    %57 = vector.load %arg7[%c0_25, %c0_26] : memref<128x128xbf16, #tpu.memory_space<vmem>>, vector<128x128xbf16>
    %cst_27 = arith.constant dense<0.000000e+00> : vector<16x128xf32>
    %58 = tpu.matmul %56, %57, %cst_27 {dimension_numbers = #tpu.dot_dimension_numbers<[1], [0], [0], [1], [0, 0, 1, 1], [], []>} : vector<16x128xbf16>, vector<128x128xbf16>, vector<16x128xf32> -> vector<16x128xf32>
    %59 = arith.addf %55, %58 : vector<16x128xf32>
    %60 = vector.broadcast %6 : vector<1x128xf32> to vector<16x128xf32>
    %61 = arith.addf %59, %60 : vector<16x128xf32>
    %cst_28 = arith.constant dense<0xFF800000> : vector<16xf32>
    %62 = vector.multi_reduction <maximumf>, %61, %cst_28 [1] : vector<16x128xf32> to vector<16xf32>
    %63 = vector.shape_cast %62 : vector<16xf32> to vector<16x1xf32>
    %64 = vector.broadcast %63 : vector<16x1xf32> to vector<16x128xf32>
    %65 = arith.subf %61, %64 : vector<16x128xf32>
    %66 = math.exp %65 : vector<16x128xf32>
    %cst_29 = arith.constant dense<0.000000e+00> : vector<16xf32>
    %67 = vector.multi_reduction <add>, %66, %cst_29 [1] : vector<16x128xf32> to vector<16xf32>
    %68 = vector.shape_cast %67 : vector<16xf32> to vector<16x1xf32>
    %69 = math.log %68 : vector<16x1xf32>
    %70 = vector.broadcast %69 : vector<16x1xf32> to vector<16x128xf32>
    %71 = arith.subf %65, %70 : vector<16x128xf32>
    %c0_30 = arith.constant 0 : index
    %c0_31 = arith.constant 0 : index
    %72 = vector.load %arg9[%c0_30, %c0_31] : memref<16x128xf32, #tpu.memory_space<vmem>>, vector<16x128xf32>
    tpu.vector_store %arg9[%c0_30, %c0_31], %71 {strides = array<i32>} : memref<16x128xf32, #tpu.memory_space<vmem>>, vector<16x128xf32>,
    return
  }
}

</mosaic_0001>

<llo_original>
// kernel: tpu_custom_call.1
$region0: #{tpu_custom_call.1}
  #allocation0 [shape = 'u32[]', space=smem, size = 0x4, offset = 0x4, fixed_abs, tag = 'smem constant byte address 0x4 - core index']
  #allocation1 [shape = 'u32[144,128]{1,0:T(1,128)}', space=vmem, size = 0x12000, scoped, tag = 'internal scratch']
  %s0 = inlined_call_operand.hbm [shape: bf16[128,128], index: 0, kind: input, shape index: {}]
  %s1 = inlined_call_operand.hbm [shape: bf16[128,128], index: 1, kind: input, shape index: {}]
  %s2 = inlined_call_operand.hbm [shape: bf16[128,512], index: 2, kind: input, shape index: {}]
  %s3 = inlined_call_operand.vmem [shape: bf16[16,128], index: 3, kind: input, shape index: {}]
  %s4 = inlined_call_operand.hbm [shape: f32[128,128], index: 4, kind: input, shape index: {}]
  %s5 = inlined_call_operand.vmem [shape: bf16[16,128], index: 5, kind: input, shape index: {}]
  %s6 = inlined_call_operand.hbm [shape: bf16[512,128], index: 6, kind: input, shape index: {}]
  %s7 = inlined_call_operand.hbm [shape: bf16[128,128], index: 7, kind: input, shape index: {}]
  %s8 = inlined_call_operand.hbm [shape: f32[8,512], index: 8, kind: input, shape index: {}]
  %s9 = inlined_call_operand.hbm [shape: f32[16,128], index: 9, kind: output, shape index: {}]
  %s10 = sld [smem:[#allocation0]]
  $region74: #{tpu_custom_call.1} parent=0
    _
  %s12 = ssub.s32 1, %s10
  %s13 = scalar_select 0, %s12, %s10
  $region1: #{tpu_custom_call.1} parent=0
    #allocation2 [shape = 'u8[32768]{0}', space=vmem, size = 0x8000, scoped, tag = 'input window, operand 0, single buffered']
    #allocation3 [shape = 's32[1]{0}', space=sflag, size = 0x4, scoped, tag = 'scoped memory for tpu_custom_call.1']
    #allocation4 [shape = 's32[1]{0}', space=sflag, size = 0x4, scoped, tag = 'scoped memory for tpu_custom_call.1']
    #allocation5 [shape = 'u8[32768]{0}', space=vmem, size = 0x8000, scoped, tag = 'input window, operand 1, single buffered']
    #allocation6 [shape = 's32[1]{0}', space=sflag, size = 0x4, scoped, tag = 'scoped memory for tpu_custom_call.1']
    #allocation7 [shape = 'u8[131072]{0}', space=vmem, size = 0x20000, scoped, tag = 'input window, operand 2, single buffered']
    #allocation8 [shape = 'u8[65536]{0}', space=vmem, size = 0x10000, scoped, tag = 'input window, operand 4, single buffered']
    #allocation9 [shape = 's32[1]{0}', space=sflag, size = 0x4, scoped, tag = 'scoped memory for tpu_custom_call.1']
    #allocation10 [shape = 'u8[131072]{0}', space=vmem, size = 0x20000, scoped, tag = 'input window, operand 6, single buffered']
    #allocation11 [shape = 'u8[32768]{0}', space=vmem, size = 0x8000, scoped, tag = 'input window, operand 7, single buffered']
    #allocation12 [shape = 's32[1]{0}', space=sflag, size = 0x4, scoped, tag = 'scoped memory for tpu_custom_call.1']
    #allocation13 [shape = 'u8[16384]{0}', space=vmem, size = 0x4000, scoped, tag = 'input window, operand 8, single buffered']
    #allocation14 [shape = 'u8[8192]{0}', space=vmem, size = 0x2000, scoped, tag = 'output window, operand 0, single buffered']
    %14 = vsyncpa [#allocation3], 0
    %15 = vsyncpa [#allocation6], 0
    %16 = vsyncpa [#allocation9], 0
    %17 = vsyncpa [#allocation12], 0
    %18 = vsyncpa [#allocation4], 0
    // Predicated region
    $region2: #{tpu_custom_call.1} parent=1 // pred_check
      _
    $region3: #{tpu_custom_call.1} parent=1 // pred_check_branch
      %20 = sbr.rel (0) target = $region5
    $region4: #{tpu_custom_call.1} parent=1 // pred_region
      %s22 = ssub.s32 1024, 1024
      %23 = vsyncadd [#allocation3], %s22
      %s24 = sshll.u32 [#allocation2], 4
      %s25 = int_to_ptr.vmem [resolvable:$true] %s24
      %30 = dma.hbm_to_vmem [thread:$0]  %s0, 1024, %s25, [#allocation3], 64, 64, 4
    $region5: #{tpu_custom_call.1} parent=1 // pred_fallthru
      _
    // Predicated region
    $region6: #{tpu_custom_call.1} parent=1 // pred_check
      _
    $region7: #{tpu_custom_call.1} parent=1 // pred_check_branch
      %32 = sbr.rel (0) target = $region9
    $region8: #{tpu_custom_call.1} parent=1 // pred_region
      %s34 = ssub.s32 1024, 1024
      %35 = vsyncadd [#allocation6], %s34
      %s36 = sshll.u32 [#allocation5], 4
      %s37 = int_to_ptr.vmem [resolvable:$true] %s36
      %42 = dma.hbm_to_vmem [thread:$0]  %s1, 1024, %s37, [#allocation6], 64, 64, 4
    $region9: #{tpu_custom_call.1} parent=1 // pred_fallthru
      _
    // Predicated region
    $region10: #{tpu_custom_call.1} parent=1 // pred_check
      _
    $region11: #{tpu_custom_call.1} parent=1 // pred_check_branch
      %44 = sbr.rel (0) target = $region13
    $region12: #{tpu_custom_call.1} parent=1 // pred_region
      %s46 = ssub.s32 4096, 4096
      %47 = vsyncadd [#allocation6], %s46
      %s48 = sshll.u32 [#allocation7], 4
      %s49 = int_to_ptr.vmem [resolvable:$true] %s48
      %54 = dma.hbm_to_vmem [thread:$0]  %s2, 4096, %s49, [#allocation6], 256, 256, 16
    $region13: #{tpu_custom_call.1} parent=1 // pred_fallthru
      _
    // Predicated region
    $region14: #{tpu_custom_call.1} parent=1 // pred_check
      _
    $region15: #{tpu_custom_call.1} parent=1 // pred_check_branch
      %56 = sbr.rel (0) target = $region17
    $region16: #{tpu_custom_call.1} parent=1 // pred_region
      _
    $region17: #{tpu_custom_call.1} parent=1 // pred_fallthru
      _
    // Predicated region
    $region18: #{tpu_custom_call.1} parent=1 // pred_check
      _
    $region19: #{tpu_custom_call.1} parent=1 // pred_check_branch
      %58 = sbr.rel (0) target = $region21
    $region20: #{tpu_custom_call.1} parent=1 // pred_region
      %s60 = ssub.s32 2048, 2048
      %61 = vsyncadd [#allocation9], %s60
      %s62 = sshll.u32 [#allocation8], 4
      %s63 = int_to_ptr.vmem [resolvable:$true] %s62
      %68 = dma.hbm_to_vmem [thread:$0]  %s4, 2048, %s63, [#allocation9], 128, 128, 8
    $region21: #{tpu_custom_call.1} parent=1 // pred_fallthru
      _
    // Predicated region
    $region22: #{tpu_custom_call.1} parent=1 // pred_check
      _
    $region23: #{tpu_custom_call.1} parent=1 // pred_check_branch
      %70 = sbr.rel (0) target = $region25
    $region24: #{tpu_custom_call.1} parent=1 // pred_region
      _
    $region25: #{tpu_custom_call.1} parent=1 // pred_fallthru
      _
    // Predicated region
    $region26: #{tpu_custom_call.1} parent=1 // pred_check
      _
    $region27: #{tpu_custom_call.1} parent=1 // pred_check_branch
      %72 = sbr.rel (0) target = $region29
    $region28: #{tpu_custom_call.1} parent=1 // pred_region
      %s74 = ssub.s32 4096, 4096
      %75 = vsyncadd [#allocation9], %s74
      %s76 = sshll.u32 [#allocation10], 4
      %s77 = int_to_ptr.vmem [resolvable:$true] %s76
      %82 = dma.hbm_to_vmem [thread:$0]  %s6, 4096, %s77, [#allocation9], 64, 64, 4
    $region29: #{tpu_custom_call.1} parent=1 // pred_fallthru
      _
    // Predicated region
    $region30: #{tpu_custom_call.1} parent=1 // pred_check
      _
    $region31: #{tpu_custom_call.1} parent=1 // pred_check_branch
      %84 = sbr.rel (0) target = $region33
    $region32: #{tpu_custom_call.1} parent=1 // pred_region
      %s86 = ssub.s32 1024, 1024
      %87 = vsyncadd [#allocation12], %s86
      %s88 = sshll.u32 [#allocation11], 4
      %s89 = int_to_ptr.vmem [resolvable:$true] %s88
      %94 = dma.hbm_to_vmem [thread:$0]  %s7, 1024, %s89, [#allocation12], 64, 64, 4
    $region33: #{tpu_custom_call.1} parent=1 // pred_fallthru
      _
    // Predicated region
    $region34: #{tpu_custom_call.1} parent=1 // pred_check
      _
    $region35: #{tpu_custom_call.1} parent=1 // pred_check_branch
      %96 = sbr.rel (0) target = $region37
    $region36: #{tpu_custom_call.1} parent=1 // pred_region
      %s98 = ssub.s32 512, 512
      %99 = vsyncadd [#allocation12], %s98
      %s101 = sshll.u32 [#allocation13], 4
      %s102 = int_to_ptr.vmem [resolvable:$true] %s101
      %104 = dma.hbm_to_vmem [thread:$0]  %s8, 512, %s102, [#allocation12]
    $region37: #{tpu_custom_call.1} parent=1 // pred_fallthru
      _
    // Predicated region
    $region38: #{tpu_custom_call.1} parent=1 // pred_check
      _
    $region39: #{tpu_custom_call.1} parent=1 // pred_check_branch
      %106 = sbr.rel (0) target = $region41
    $region40: #{tpu_custom_call.1} parent=1 // pred_region
      %107 = dma.done [#allocation3], 1024
    $region41: #{tpu_custom_call.1} parent=1 // pred_fallthru
      _
    // Predicated region
    $region42: #{tpu_custom_call.1} parent=1 // pred_check
      _
    $region43: #{tpu_custom_call.1} parent=1 // pred_check_branch
      %109 = sbr.rel (0) target = $region45
    $region44: #{tpu_custom_call.1} parent=1 // pred_region
      %110 = dma.done [#allocation6], 1024
    $region45: #{tpu_custom_call.1} parent=1 // pred_fallthru
      _
    // Predicated region
    $region46: #{tpu_custom_call.1} parent=1 // pred_check
      _
    $region47: #{tpu_custom_call.1} parent=1 // pred_check_branch
      %112 = sbr.rel (0) target = $region49
    $region48: #{tpu_custom_call.1} parent=1 // pred_region
      %113 = dma.done [#allocation6], 4096
    $region49: #{tpu_custom_call.1} parent=1 // pred_fallthru
      _
    // Predicated region
    $region50: #{tpu_custom_call.1} parent=1 // pred_check
      _
    $region51: #{tpu_custom_call.1} parent=1 // pred_check_branch
      %115 = sbr.rel (0) target = $region53
    $region52: #{tpu_custom_call.1} parent=1 // pred_region
      %116 = dma.done [#allocation9], 2048
    $region53: #{tpu_custom_call.1} parent=1 // pred_fallthru
      _
    // Predicated region
    $region54: #{tpu_custom_call.1} parent=1 // pred_check
      _
    $region55: #{tpu_custom_call.1} parent=1 // pred_check_branch
      %118 = sbr.rel (0) target = $region57
    $region56: #{tpu_custom_call.1} parent=1 // pred_region
      %119 = dma.done [#allocation9], 4096
    $region57: #{tpu_custom_call.1} parent=1 // pred_fallthru
      _
    // Predicated region
    $region58: #{tpu_custom_call.1} parent=1 // pred_check
      _
    $region59: #{tpu_custom_call.1} parent=1 // pred_check_branch
      %121 = sbr.rel (0) target = $region61
    $region60: #{tpu_custom_call.1} parent=1 // pred_region
      %122 = dma.done [#allocation12], 1024
    $region61: #{tpu_custom_call.1} parent=1 // pred_fallthru
      _
    // Predicated region
    $region62: #{tpu_custom_call.1} parent=1 // pred_check
      _
    $region63: #{tpu_custom_call.1} parent=1 // pred_check_branch
      %124 = sbr.rel (0) target = $region65
    $region64: #{tpu_custom_call.1} parent=1 // pred_region
      %125 = dma.done [#allocation12], 512
    $region65: #{tpu_custom_call.1} parent=1 // pred_fallthru
      _
    %v127 = vld [vmem:[#allocation13] sm:$0xff]
    %v128 = vld [vmem:[#allocation13 + $0x8] sm:$0xff]
    %v129 = vld [vmem:[#allocation13 + $0x10] sm:$0xff]
    %v130 = vld [vmem:[#allocation13 + $0x18] sm:$0xff]
    %v131 = vld [vmem:[#allocation2] sm:$0xf]
    %v132 = vld [vmem:[#allocation2 + $0x4] sm:$0xf]
    %v133 = vld [vmem:[#allocation2 + $0x8] sm:$0xf]
    %v134 = vld [vmem:[#allocation2 + $0xc] sm:$0xf]
    %v135 = vld [vmem:[#allocation2 + $0x10] sm:$0xf]
    %v136 = vld [vmem:[#allocation2 + $0x14] sm:$0xf]
    %v137 = vld [vmem:[#allocation2 + $0x18] sm:$0xf]
    %v138 = vld [vmem:[#allocation2 + $0x1c] sm:$0xf]
    %v139 = vld [vmem:[#allocation2 + $0x20] sm:$0xf]
    %v140 = vld [vmem:[#allocation2 + $0x24] sm:$0xf]
    %v141 = vld [vmem:[#allocation2 + $0x28] sm:$0xf]
    %v142 = vld [vmem:[#allocation2 + $0x2c] sm:$0xf]
    %v143 = vld [vmem:[#allocation2 + $0x30] sm:$0xf]
    %v144 = vld [vmem:[#allocation2 + $0x34] sm:$0xf]
    %v145 = vld [vmem:[#allocation2 + $0x38] sm:$0xf]
    %v146 = vld [vmem:[#allocation2 + $0x3c] sm:$0xf]
    %v147 = vld [vmem:[#allocation5] sm:$0xf]
    %v148 = vld [vmem:[#allocation5 + $0x4] sm:$0xf]
    %v149 = vld [vmem:[#allocation5 + $0x8] sm:$0xf]
    %v150 = vld [vmem:[#allocation5 + $0xc] sm:$0xf]
    %v151 = vld [vmem:[#allocation5 + $0x10] sm:$0xf]
    %v152 = vld [vmem:[#allocation5 + $0x14] sm:$0xf]
    %v153 = vld [vmem:[#allocation5 + $0x18] sm:$0xf]
    %v154 = vld [vmem:[#allocation5 + $0x1c] sm:$0xf]
    %v155 = vld [vmem:[#allocation5 + $0x20] sm:$0xf]
    %v156 = vld [vmem:[#allocation5 + $0x24] sm:$0xf]
    %v157 = vld [vmem:[#allocation5 + $0x28] sm:$0xf]
    %v158 = vld [vmem:[#allocation5 + $0x2c] sm:$0xf]
    %v159 = vld [vmem:[#allocation5 + $0x30] sm:$0xf]
    %v160 = vld [vmem:[#allocation5 + $0x34] sm:$0xf]
    %v161 = vld [vmem:[#allocation5 + $0x38] sm:$0xf]
    %v162 = vld [vmem:[#allocation5 + $0x3c] sm:$0xf]
    %v163 = vlaneseq
    %v164 = vshrl.u32 %v163, 7
    %v165 = vsub.s32 0, %v164
    %v166 = vrot.slane %v127, %v165
    %v183 = vunpack.c.l.b16 %v131
    %v184 = vunpack.c.l.b16 %v132
    %v185 = vunpack.c.l.b16 %v133
    %v186 = vunpack.c.l.b16 %v134
    %v187 = vunpack.c.l.b16 %v135
    %v188 = vunpack.c.l.b16 %v136
    %v189 = vunpack.c.l.b16 %v137
    %v190 = vunpack.c.l.b16 %v138
    %v191 = vunpack.c.l.b16 %v139
    %v192 = vunpack.c.l.b16 %v140
    %v193 = vunpack.c.l.b16 %v141
    %v194 = vunpack.c.l.b16 %v142
    %v195 = vunpack.c.l.b16 %v143
    %v196 = vunpack.c.l.b16 %v144
    %v197 = vunpack.c.l.b16 %v145
    %v198 = vunpack.c.l.b16 %v146
    %v199 = vpack.c.b16 %v184, %v183
    %v200 = vpack.c.b16 %v186, %v185
    %v201 = vpack.c.b16 %v188, %v187
    %v202 = vpack.c.b16 %v190, %v189
    %v203 = vpack.c.b16 %v192, %v191
    %v204 = vpack.c.b16 %v194, %v193
    %v205 = vpack.c.b16 %v196, %v195
    %v206 = vpack.c.b16 %v198, %v197
    %v231 = vunpack.c.l.b16 %v147
    %v232 = vunpack.c.l.b16 %v148
    %v233 = vunpack.c.l.b16 %v149
    %v234 = vunpack.c.l.b16 %v150
    %v235 = vunpack.c.l.b16 %v151
    %v236 = vunpack.c.l.b16 %v152
    %v237 = vunpack.c.l.b16 %v153
    %v238 = vunpack.c.l.b16 %v154
    %v239 = vunpack.c.l.b16 %v155
    %v240 = vunpack.c.l.b16 %v156
    %v241 = vunpack.c.l.b16 %v157
    %v242 = vunpack.c.l.b16 %v158
    %v243 = vunpack.c.l.b16 %v159
    %v244 = vunpack.c.l.b16 %v160
    %v245 = vunpack.c.l.b16 %v161
    %v246 = vunpack.c.l.b16 %v162
    %v247 = vpack.c.b16 %v232, %v231
    %v248 = vpack.c.b16 %v234, %v233
    %v249 = vpack.c.b16 %v236, %v235
    %v250 = vpack.c.b16 %v238, %v237
    %v251 = vpack.c.b16 %v240, %v239
    %v252 = vpack.c.b16 %v242, %v241
    %v253 = vpack.c.b16 %v244, %v243
    %v254 = vpack.c.b16 %v246, %v245
    %263 = vmatprep.subr.bf16.mxu0 0
    %264 = vmatpush1.bf16.msra.mxu0 %v247
    %265 = vmatprep.subr.bf16.mxu0 0
    %266 = vmatpush1.bf16.msra.mxu0 %v248
    %267 = vmatprep.subr.bf16.mxu0 0
    %268 = vmatpush1.bf16.msra.mxu0 %v249
    %269 = vmatprep.subr.bf16.mxu0 0
    %270 = vmatpush1.bf16.msra.mxu0 %v250
    %271 = vmatprep.subr.bf16.mxu0 0
    %272 = vmatpush1.bf16.msra.mxu0 %v251
    %273 = vmatprep.subr.bf16.mxu0 0
    %274 = vmatpush1.bf16.msra.mxu0 %v252
    %275 = vmatprep.subr.bf16.mxu0 0
    %276 = vmatpush1.bf16.msra.mxu0 %v253
    %277 = vmatprep.subr.bf16.mxu0 0
    %278 = vmatpush1.bf16.msra.mxu0 %v254
    %279 = vmatprep.subr.bf16.mxu0 0
    %280 = vmatpush1.bf16.msra.mxu0 0
    %281 = vmatprep.subr.bf16.mxu0 0
    %282 = vmatpush1.bf16.msra.mxu0 0
    %283 = vmatprep.subr.bf16.mxu0 0
    %284 = vmatpush1.bf16.msra.mxu0 0
    %285 = vmatprep.subr.bf16.mxu0 0
    %286 = vmatpush1.bf16.msra.mxu0 0
    %287 = vmatprep.subr.bf16.mxu0 0
    %288 = vmatpush1.bf16.msra.mxu0 0
    %289 = vmatprep.subr.bf16.mxu0 0
    %290 = vmatpush1.bf16.msra.mxu0 0
    %291 = vmatprep.subr.bf16.mxu0 0
    %292 = vmatpush1.bf16.msra.mxu0 0
    %293 = vmatprep.subr.bf16.mxu0 0
    %294 = vmatpush1.bf16.msra.mxu0 0
    %295 = vmatprep.mubr.bf16.mxu0 0
    %296 = vmatmul.mubr.bf16.gmra.mrb[0].mxu0 %v199
    %v297 = vpop.f32.mrb[0].mxu0
    %v298 = vadd.f32 %v166, %v297
    %v299 = vpop.f32.mrb[0].mxu0
    %v300 = vpop.f32.mrb[0].mxu0
    %v301 = vadd.f32 %v166, %v300
    %v302 = vpop.f32.mrb[0].mxu0
    %303 = vmatprep.mubr.bf16.mxu0 0
    %304 = vmatmul.mubr.bf16.gmra.mrb[0].mxu0 %v200
    %v305 = vpop.f32.mrb[0].mxu0
    %v306 = vadd.f32 %v166, %v305
    %v307 = vpop.f32.mrb[0].mxu0
    %v308 = vpop.f32.mrb[0].mxu0
    %v309 = vadd.f32 %v166, %v308
    %v310 = vpop.f32.mrb[0].mxu0
    %311 = vmatprep.mubr.bf16.mxu0 0
    %312 = vmatmul.mubr.bf16.gmra.mrb[0].mxu0 %v201
    %v313 = vpop.f32.mrb[0].mxu0
    %v314 = vadd.f32 %v166, %v313
    %v315 = vpop.f32.mrb[0].mxu0
    %v316 = vpop.f32.mrb[0].mxu0
    %v317 = vadd.f32 %v166, %v316
    %v318 = vpop.f32.mrb[0].mxu0
    %319 = vmatprep.mubr.bf16.mxu0 0
    %320 = vmatmul.mubr.bf16.gmra.mrb[0].mxu0 %v202
    %v321 = vpop.f32.mrb[0].mxu0
    %v322 = vadd.f32 %v166, %v321
    %v323 = vpop.f32.mrb[0].mxu0
    %v324 = vpop.f32.mrb[0].mxu0
    %v325 = vadd.f32 %v166, %v324
    %v326 = vpop.f32.mrb[0].mxu0
    %327 = vmatprep.mubr.bf16.mxu0 0
    %328 = vmatmul.mubr.bf16.gmra.mrb[0].mxu0 %v203
    %v329 = vpop.f32.mrb[0].mxu0
    %v330 = vadd.f32 %v166, %v329
    %v331 = vpop.f32.mrb[0].mxu0
    %v332 = vpop.f32.mrb[0].mxu0
    %v333 = vadd.f32 %v166, %v332
    %v334 = vpop.f32.mrb[0].mxu0
    %335 = vmatprep.mubr.bf16.mxu0 0
    %336 = vmatmul.mubr.bf16.gmra.mrb[0].mxu0 %v204
    %v337 = vpop.f32.mrb[0].mxu0
    %v338 = vadd.f32 %v166, %v337
    %v339 = vpop.f32.mrb[0].mxu0
    %v340 = vpop.f32.mrb[0].mxu0
    %v341 = vadd.f32 %v166, %v340
    %v342 = vpop.f32.mrb[0].mxu0
    %343 = vmatprep.mubr.bf16.mxu0 0
    %344 = vmatmul.mubr.bf16.gmra.mrb[0].mxu0 %v205
    %v345 = vpop.f32.mrb[0].mxu0
    %v346 = vadd.f32 %v166, %v345
    %v347 = vpop.f32.mrb[0].mxu0
    %v348 = vpop.f32.mrb[0].mxu0
    %v349 = vadd.f32 %v166, %v348
    %v350 = vpop.f32.mrb[0].mxu0
    %351 = vmatprep.mubr.bf16.mxu0 0
    %352 = vmatmul.mubr.bf16.gmra.mrb[0].mxu0 %v206
    %v353 = vpop.f32.mrb[0].mxu0
    %v354 = vadd.f32 %v166, %v353
    %v355 = vpop.f32.mrb[0].mxu0
    %v356 = vpop.f32.mrb[0].mxu0
    %v357 = vadd.f32 %v166, %v356
    %v358 = vpop.f32.mrb[0].mxu0
    %359 = vdwg.mxu0
    %v360 = vmax.f32 %v298, 0.0
    %v361 = vmax.f32 %v301, 0.0
    %v362 = vmax.f32 %v306, 0.0
    %v363 = vmax.f32 %v309, 0.0
    %v364 = vmax.f32 %v314, 0.0
    %v365 = vmax.f32 %v317, 0.0
    %v366 = vmax.f32 %v322, 0.0
    %v367 = vmax.f32 %v325, 0.0
    %v368 = vmax.f32 %v330, 0.0
    %v369 = vmax.f32 %v333, 0.0
    %v370 = vmax.f32 %v338, 0.0
    %v371 = vmax.f32 %v341, 0.0
    %v372 = vmax.f32 %v346, 0.0
    %v373 = vmax.f32 %v349, 0.0
    %v374 = vmax.f32 %v354, 0.0
    %v375 = vmax.f32 %v357, 0.0
    %v376 = vpack.c.bf16 %v361, %v360
    %v377 = vpack.c.bf16 %v363, %v362
    %v378 = vpack.c.bf16 %v365, %v364
    %v379 = vpack.c.bf16 %v367, %v366
    %v380 = vpack.c.bf16 %v369, %v368
    %v381 = vpack.c.bf16 %v371, %v370
    %v382 = vpack.c.bf16 %v373, %v372
    %v383 = vpack.c.bf16 %v375, %v374
    %384 = vmatprep.subr.bf16.mxu0 0
    %385 = vmatpush1.bf16.msra.mxu0 %v376
    %386 = vmatprep.subr.bf16.mxu0 0
    %387 = vmatpush1.bf16.msra.mxu0 %v377
    %388 = vmatprep.subr.bf16.mxu0 0
    %389 = vmatpush1.bf16.msra.mxu0 %v378
    %390 = vmatprep.subr.bf16.mxu0 0
    %391 = vmatpush1.bf16.msra.mxu0 %v379
    %392 = vmatprep.subr.bf16.mxu0 0
    %393 = vmatpush1.bf16.msra.mxu0 %v380
    %394 = vmatprep.subr.bf16.mxu0 0
    %395 = vmatpush1.bf16.msra.mxu0 %v381
    %396 = vmatprep.subr.bf16.mxu0 0
    %397 = vmatpush1.bf16.msra.mxu0 %v382
    %398 = vmatprep.subr.bf16.mxu0 0
    %399 = vmatpush1.bf16.msra.mxu0 %v383
    %400 = vmatprep.subr.bf16.mxu0 0
    %401 = vmatpush1.bf16.msra.mxu0 0
    %402 = vmatprep.subr.bf16.mxu0 0
    %403 = vmatpush1.bf16.msra.mxu0 0
    %404 = vmatprep.subr.bf16.mxu0 0
    %405 = vmatpush1.bf16.msra.mxu0 0
    %406 = vmatprep.subr.bf16.mxu0 0
    %407 = vmatpush1.bf16.msra.mxu0 0
    %408 = vmatprep.subr.bf16.mxu0 0
    %409 = vmatpush1.bf16.msra.mxu0 0
    %410 = vmatprep.subr.bf16.mxu0 0
    %411 = vmatpush1.bf16.msra.mxu0 0
    %412 = vmatprep.subr.bf16.mxu0 0
    %413 = vmatpush1.bf16.msra.mxu0 0
    %414 = vmatprep.subr.bf16.mxu0 0
    %415 = vmatpush1.bf16.msra.mxu0 0
    %416 = vmatprep.mubr.bf16.mxu0 0
    %417 = vmatmul.mubr.bf16.gmra.mrb[0].mxu0 %v199
    %v418 = vpop.f32.mrb[0].mxu0
    %v419 = vadd.f32 0.0, %v418
    %v420 = vpop.f32.mrb[0].mxu0
    %v421 = vpop.f32.mrb[0].mxu0
    %v422 = vadd.f32 0.0, %v421
    %v423 = vpop.f32.mrb[0].mxu0
    %424 = vmatprep.mubr.bf16.mxu0 0
    %425 = vmatmul.mubr.bf16.gmra.mrb[0].mxu0 %v200
    %v426 = vpop.f32.mrb[0].mxu0
    %v427 = vadd.f32 0.0, %v426
    %v428 = vpop.f32.mrb[0].mxu0
    %v429 = vpop.f32.mrb[0].mxu0
    %v430 = vadd.f32 0.0, %v429
    %v431 = vpop.f32.mrb[0].mxu0
    %432 = vmatprep.mubr.bf16.mxu0 0
    %433 = vmatmul.mubr.bf16.gmra.mrb[0].mxu0 %v201
    %v434 = vpop.f32.mrb[0].mxu0
    %v435 = vadd.f32 0.0, %v434
    %v436 = vpop.f32.mrb[0].mxu0
    %v437 = vpop.f32.mrb[0].mxu0
    %v438 = vadd.f32 0.0, %v437
    %v439 = vpop.f32.mrb[0].mxu0
    %440 = vmatprep.mubr.bf16.mxu0 0
    %441 = vmatmul.mubr.bf16.gmra.mrb[0].mxu0 %v202
    %v442 = vpop.f32.mrb[0].mxu0
    %v443 = vadd.f32 0.0, %v442
    %v444 = vpop.f32.mrb[0].mxu0
    %v445 = vpop.f32.mrb[0].mxu0
    %v446 = vadd.f32 0.0, %v445
    %v447 = vpop.f32.mrb[0].mxu0
    %448 = vmatprep.mubr.bf16.mxu0 0
    %449 = vmatmul.mubr.bf16.gmra.mrb[0].mxu0 %v203
    %v450 = vpop.f32.mrb[0].mxu0
    %v451 = vadd.f32 0.0, %v450
    %v452 = vpop.f32.mrb[0].mxu0
    %v453 = vpop.f32.mrb[0].mxu0
    %v454 = vadd.f32 0.0, %v453
    %v455 = vpop.f32.mrb[0].mxu0
    %456 = vmatprep.mubr.bf16.mxu0 0
    %457 = vmatmul.mubr.bf16.gmra.mrb[0].mxu0 %v204
    %v458 = vpop.f32.mrb[0].mxu0
    %v459 = vadd.f32 0.0, %v458
    %v460 = vpop.f32.mrb[0].mxu0
    %v461 = vpop.f32.mrb[0].mxu0
    %v462 = vadd.f32 0.0, %v461
    %v463 = vpop.f32.mrb[0].mxu0
    %464 = vmatprep.mubr.bf16.mxu0 0
    %465 = vmatmul.mubr.bf16.gmra.mrb[0].mxu0 %v205
    %v466 = vpop.f32.mrb[0].mxu0
    %v467 = vadd.f32 0.0, %v466
    %v468 = vpop.f32.mrb[0].mxu0
    %v469 = vpop.f32.mrb[0].mxu0
    %v470 = vadd.f32 0.0, %v469
    %v471 = vpop.f32.mrb[0].mxu0
    %472 = vmatprep.mubr.bf16.mxu0 0
    %473 = vmatmul.mubr.bf16.gmra.mrb[0].mxu0 %v206
    %v474 = vpop.f32.mrb[0].mxu0
    %v475 = vadd.f32 0.0, %v474
    %v476 = vpop.f32.mrb[0].mxu0
    %v477 = vpop.f32.mrb[0].mxu0
    %v478 = vadd.f32 0.0, %v477
    %v479 = vpop.f32.mrb[0].mxu0
    %480 = vdwg.mxu0
    %v481 = vpack.c.bf16 %v422, %v419
    %v482 = vpack.c.bf16 %v430, %v427
    %v483 = vpack.c.bf16 %v438, %v435
    %v484 = vpack.c.bf16 %v446, %v443
    %v485 = vpack.c.bf16 %v454, %v451
    %v486 = vpack.c.bf16 %v462, %v459
    %v487 = vpack.c.bf16 %v470, %v467
    %v488 = vpack.c.bf16 %v478, %v475
    %v489 = vld [vmem:[#allocation7] sm:$0xff]
    %v490 = vld [vmem:[#allocation7 + $0x8] sm:$0xff]
    %v491 = vld [vmem:[#allocation7 + $0x10] sm:$0xff]
    %v492 = vld [vmem:[#allocation7 + $0x18] sm:$0xff]
    %v493 = vld [vmem:[#allocation7 + $0x20] sm:$0xff]
    %v494 = vld [vmem:[#allocation7 + $0x28] sm:$0xff]
    %v495 = vld [vmem:[#allocation7 + $0x30] sm:$0xff]
    %v496 = vld [vmem:[#allocation7 + $0x38] sm:$0xff]
    %v497 = vld [vmem:[#allocation7 + $0x40] sm:$0xff]
    %v498 = vld [vmem:[#allocation7 + $0x48] sm:$0xff]
    %v499 = vld [vmem:[#allocation7 + $0x50] sm:$0xff]
    %v500 = vld [vmem:[#allocation7 + $0x58] sm:$0xff]
    %v501 = vld [vmem:[#allocation7 + $0x60] sm:$0xff]
    %v502 = vld [vmem:[#allocation7 + $0x68] sm:$0xff]
    %v503 = vld [vmem:[#allocation7 + $0x70] sm:$0xff]
    %v504 = vld [vmem:[#allocation7 + $0x78] sm:$0xff]
    %v505 = vld [vmem:[#allocation7 + $0x80] sm:$0xff]
    %v506 = vld [vmem:[#allocation7 + $0x88] sm:$0xff]
    %v507 = vld [vmem:[#allocation7 + $0x90] sm:$0xff]
    %v508 = vld [vmem:[#allocation7 + $0x98] sm:$0xff]
    %v509 = vld [vmem:[#allocation7 + $0xa0] sm:$0xff]
    %v510 = vld [vmem:[#allocation7 + $0xa8] sm:$0xff]
    %v511 = vld [vmem:[#allocation7 + $0xb0] sm:$0xff]
    %v512 = vld [vmem:[#allocation7 + $0xb8] sm:$0xff]
    %v513 = vld [vmem:[#allocation7 + $0xc0] sm:$0xff]
    %v514 = vld [vmem:[#allocation7 + $0xc8] sm:$0xff]
    %v515 = vld [vmem:[#allocation7 + $0xd0] sm:$0xff]
    %v516 = vld [vmem:[#allocation7 + $0xd8] sm:$0xff]
    %v517 = vld [vmem:[#allocation7 + $0xe0] sm:$0xff]
    %v518 = vld [vmem:[#allocation7 + $0xe8] sm:$0xff]
    %v519 = vld [vmem:[#allocation7 + $0xf0] sm:$0xff]
    %v520 = vld [vmem:[#allocation7 + $0xf8] sm:$0xff]
    %v521 = vlaneseq
    %v522 = vshrl.u32 %v521, 7
    %v523 = vsub.s32 1, %v522
    %v524 = vrot.slane %v127, %v523
    %v525 = vlaneseq
    %v526 = vshrl.u32 %v525, 7
    %v527 = vsub.s32 1, %v526
    %v528 = vrot.slane %v128, %v527
    %v529 = vlaneseq
    %v530 = vshrl.u32 %v529, 7
    %v531 = vsub.s32 1, %v530
    %v532 = vrot.slane %v129, %v531
    %v533 = vlaneseq
    %v534 = vshrl.u32 %v533, 7
    %v535 = vsub.s32 1, %v534
    %v536 = vrot.slane %v130, %v535
    %v569 = vunpack.c.l.b16 %v489
    %v570 = vunpack.c.h.b16 %v489
    %v571 = vunpack.c.l.b16 %v490
    %v572 = vunpack.c.h.b16 %v490
    %v573 = vunpack.c.l.b16 %v491
    %v574 = vunpack.c.h.b16 %v491
    %v575 = vunpack.c.l.b16 %v492
    %v576 = vunpack.c.h.b16 %v492
    %v577 = vunpack.c.l.b16 %v493
    %v578 = vunpack.c.h.b16 %v493
    %v579 = vunpack.c.l.b16 %v494
    %v580 = vunpack.c.h.b16 %v494
    %v581 = vunpack.c.l.b16 %v495
    %v582 = vunpack.c.h.b16 %v495
    %v583 = vunpack.c.l.b16 %v496
    %v584 = vunpack.c.h.b16 %v496
    %v585 = vunpack.c.l.b16 %v497
    %v586 = vunpack.c.h.b16 %v497
    %v587 = vunpack.c.l.b16 %v498
    %v588 = vunpack.c.h.b16 %v498
    %v589 = vunpack.c.l.b16 %v499
    %v590 = vunpack.c.h.b16 %v499
    %v591 = vunpack.c.l.b16 %v500
    %v592 = vunpack.c.h.b16 %v500
    %v593 = vunpack.c.l.b16 %v501
    %v594 = vunpack.c.h.b16 %v501
    %v595 = vunpack.c.l.b16 %v502
    %v596 = vunpack.c.h.b16 %v502
    %v597 = vunpack.c.l.b16 %v503
    %v598 = vunpack.c.h.b16 %v503
    %v599 = vunpack.c.l.b16 %v504
    %v600 = vunpack.c.h.b16 %v504
    %v601 = vunpack.c.l.b16 %v505
    %v602 = vunpack.c.h.b16 %v505
    %v603 = vunpack.c.l.b16 %v506
    %v604 = vunpack.c.h.b16 %v506
    %v605 = vunpack.c.l.b16 %v507
    %v606 = vunpack.c.h.b16 %v507
    %v607 = vunpack.c.l.b16 %v508
    %v608 = vunpack.c.h.b16 %v508
    %v609 = vunpack.c.l.b16 %v509
    %v610 = vunpack.c.h.b16 %v509
    %v611 = vunpack.c.l.b16 %v510
    %v612 = vunpack.c.h.b16 %v510
    %v613 = vunpack.c.l.b16 %v511
    %v614 = vunpack.c.h.b16 %v511
    %v615 = vunpack.c.l.b16 %v512
    %v616 = vunpack.c.h.b16 %v512
    %v617 = vunpack.c.l.b16 %v513
    %v618 = vunpack.c.h.b16 %v513
    %v619 = vunpack.c.l.b16 %v514
    %v620 = vunpack.c.h.b16 %v514
    %v621 = vunpack.c.l.b16 %v515
    %v622 = vunpack.c.h.b16 %v515
    %v623 = vunpack.c.l.b16 %v516
    %v624 = vunpack.c.h.b16 %v516
    %v625 = vunpack.c.l.b16 %v517
    %v626 = vunpack.c.h.b16 %v517
    %v627 = vunpack.c.l.b16 %v518
    %v628 = vunpack.c.h.b16 %v518
    %v629 = vunpack.c.l.b16 %v519
    %v630 = vunpack.c.h.b16 %v519
    %v631 = vunpack.c.l.b16 %v520
    %v632 = vunpack.c.h.b16 %v520
    %v633 = vpack.c.b16 %v573, %v569
    %v634 = vpack.c.b16 %v574, %v570
    %v635 = vpack.c.b16 %v575, %v571
    %v636 = vpack.c.b16 %v576, %v572
    %v637 = vpack.c.b16 %v581, %v577
    %v638 = vpack.c.b16 %v582, %v578
    %v639 = vpack.c.b16 %v583, %v579
    %v640 = vpack.c.b16 %v584, %v580
    %v641 = vpack.c.b16 %v589, %v585
    %v642 = vpack.c.b16 %v590, %v586
    %v643 = vpack.c.b16 %v591, %v587
    %v644 = vpack.c.b16 %v592, %v588
    %v645 = vpack.c.b16 %v597, %v593
    %v646 = vpack.c.b16 %v598, %v594
    %v647 = vpack.c.b16 %v599, %v595
    %v648 = vpack.c.b16 %v600, %v596
    %v649 = vpack.c.b16 %v605, %v601
    %v650 = vpack.c.b16 %v606, %v602
    %v651 = vpack.c.b16 %v607, %v603
    %v652 = vpack.c.b16 %v608, %v604
    %v653 = vpack.c.b16 %v613, %v609
    %v654 = vpack.c.b16 %v614, %v610
    %v655 = vpack.c.b16 %v615, %v611
    %v656 = vpack.c.b16 %v616, %v612
    %v657 = vpack.c.b16 %v621, %v617
    %v658 = vpack.c.b16 %v622, %v618
    %v659 = vpack.c.b16 %v623, %v619
    %v660 = vpack.c.b16 %v624, %v620
    %v661 = vpack.c.b16 %v629, %v625
    %v662 = vpack.c.b16 %v630, %v626
    %v663 = vpack.c.b16 %v631, %v627
    %v664 = vpack.c.b16 %v632, %v628
    %697 = vmatprep.subr.bf16.mxu0 %v634
    %698 = vmatpush1.bf16.msra.mxu0 %v633
    %699 = vmatprep.subr.bf16.mxu0 %v638
    %700 = vmatpush1.bf16.msra.mxu0 %v637
    %701 = vmatprep.subr.bf16.mxu0 %v642
    %702 = vmatpush1.bf16.msra.mxu0 %v641
    %703 = vmatprep.subr.bf16.mxu0 %v646
    %704 = vmatpush1.bf16.msra.mxu0 %v645
    %705 = vmatprep.subr.bf16.mxu0 %v650
    %706 = vmatpush1.bf16.msra.mxu0 %v649
    %707 = vmatprep.subr.bf16.mxu0 %v654
    %708 = vmatpush1.bf16.msra.mxu0 %v653
    %709 = vmatprep.subr.bf16.mxu0 %v658
    %710 = vmatpush1.bf16.msra.mxu0 %v657
    %711 = vmatprep.subr.bf16.mxu0 %v662
    %712 = vmatpush1.bf16.msra.mxu0 %v661
    %713 = vmatprep.subr.bf16.mxu0 0
    %714 = vmatpush1.bf16.msra.mxu0 0
    %715 = vmatprep.subr.bf16.mxu0 0
    %716 = vmatpush1.bf16.msra.mxu0 0
    %717 = vmatprep.subr.bf16.mxu0 0
    %718 = vmatpush1.bf16.msra.mxu0 0
    %719 = vmatprep.subr.bf16.mxu0 0
    %720 = vmatpush1.bf16.msra.mxu0 0
    %721 = vmatprep.subr.bf16.mxu0 0
    %722 = vmatpush1.bf16.msra.mxu0 0
    %723 = vmatprep.subr.bf16.mxu0 0
    %724 = vmatpush1.bf16.msra.mxu0 0
    %725 = vmatprep.subr.bf16.mxu0 0
    %726 = vmatpush1.bf16.msra.mxu0 0
    %727 = vmatprep.subr.bf16.mxu0 0
    %728 = vmatpush1.bf16.msra.mxu0 0
    %729 = vmatprep.mubr.bf16.mxu0 0
    %730 = vmatmul.mubr.bf16.gmra.mrb[0].mxu0 %v481
    %v731 = vpop.f32.mrb[0].mxu0
    %v732 = vadd.f32 %v524, %v731
    %v733 = vpop.f32.mrb[0].mxu0
    %v734 = vadd.f32 %v528, %v733
    %v735 = vpop.f32.mrb[0].mxu0
    %v736 = vadd.f32 %v524, %v735
    %v737 = vpop.f32.mrb[0].mxu0
    %v738 = vadd.f32 %v528, %v737
    %739 = vmatprep.mubr.bf16.mxu0 0
    %740 = vmatmul.mubr.bf16.gmra.mrb[0].mxu0 %v482
    %v741 = vpop.f32.mrb[0].mxu0
    %v742 = vadd.f32 %v524, %v741
    %v743 = vpop.f32.mrb[0].mxu0
    %v744 = vadd.f32 %v528, %v743
    %v745 = vpop.f32.mrb[0].mxu0
    %v746 = vadd.f32 %v524, %v745
    %v747 = vpop.f32.mrb[0].mxu0
    %v748 = vadd.f32 %v528, %v747
    %749 = vmatprep.mubr.bf16.mxu0 0
    %750 = vmatmul.mubr.bf16.gmra.mrb[0].mxu0 %v483
    %v751 = vpop.f32.mrb[0].mxu0
    %v752 = vadd.f32 %v524, %v751
    %v753 = vpop.f32.mrb[0].mxu0
    %v754 = vadd.f32 %v528, %v753
    %v755 = vpop.f32.mrb[0].mxu0
    %v756 = vadd.f32 %v524, %v755
    %v757 = vpop.f32.mrb[0].mxu0
    %v758 = vadd.f32 %v528, %v757
    %759 = vmatprep.mubr.bf16.mxu0 0
    %760 = vmatmul.mubr.bf16.gmra.mrb[0].mxu0 %v484
    %v761 = vpop.f32.mrb[0].mxu0
    %v762 = vadd.f32 %v524, %v761
    %v763 = vpop.f32.mrb[0].mxu0
    %v764 = vadd.f32 %v528, %v763
    %v765 = vpop.f32.mrb[0].mxu0
    %v766 = vadd.f32 %v524, %v765
    %v767 = vpop.f32.mrb[0].mxu0
    %v768 = vadd.f32 %v528, %v767
    %769 = vmatprep.mubr.bf16.mxu0 0
    %770 = vmatmul.mubr.bf16.gmra.mrb[0].mxu0 %v485
    %v771 = vpop.f32.mrb[0].mxu0
    %v772 = vadd.f32 %v524, %v771
    %v773 = vpop.f32.mrb[0].mxu0
    %v774 = vadd.f32 %v528, %v773
    %v775 = vpop.f32.mrb[0].mxu0
    %v776 = vadd.f32 %v524, %v775
    %v777 = vpop.f32.mrb[0].mxu0
    %v778 = vadd.f32 %v528, %v777
    %779 = vmatprep.mubr.bf16.mxu0 0
    %780 = vmatmul.mubr.bf16.gmra.mrb[0].mxu0 %v486
    %v781 = vpop.f32.mrb[0].mxu0
    %v782 = vadd.f32 %v524, %v781
    %v783 = vpop.f32.mrb[0].mxu0
    %v784 = vadd.f32 %v528, %v783
    %v785 = vpop.f32.mrb[0].mxu0
    %v786 = vadd.f32 %v524, %v785
    %v787 = vpop.f32.mrb[0].mxu0
    %v788 = vadd.f32 %v528, %v787
    %789 = vmatprep.mubr.bf16.mxu0 0
    %790 = vmatmul.mubr.bf16.gmra.mrb[0].mxu0 %v487
    %v791 = vpop.f32.mrb[0].mxu0
    %v792 = vadd.f32 %v524, %v791
    %v793 = vpop.f32.mrb[0].mxu0
    %v794 = vadd.f32 %v528, %v793
    %v795 = vpop.f32.mrb[0].mxu0
    %v796 = vadd.f32 %v524, %v795
    %v797 = vpop.f32.mrb[0].mxu0
    %v798 = vadd.f32 %v528, %v797
    %799 = vmatprep.mubr.bf16.mxu0 0
    %800 = vmatmul.mubr.bf16.gmra.mrb[0].mxu0 %v488
    %v801 = vpop.f32.mrb[0].mxu0
    %v802 = vadd.f32 %v524, %v801
    %v803 = vpop.f32.mrb[0].mxu0
    %v804 = vadd.f32 %v528, %v803
    %v805 = vpop.f32.mrb[0].mxu0
    %v806 = vadd.f32 %v524, %v805
    %v807 = vpop.f32.mrb[0].mxu0
    %v808 = vadd.f32 %v528, %v807
    %809 = vdwg.mxu0
    %810 = vmatprep.subr.bf16.mxu0 %v636
    %811 = vmatpush1.bf16.msra.mxu0 %v635
    %812 = vmatprep.subr.bf16.mxu0 %v640
    %813 = vmatpush1.bf16.msra.mxu0 %v639
    %814 = vmatprep.subr.bf16.mxu0 %v644
    %815 = vmatpush1.bf16.msra.mxu0 %v643
    %816 = vmatprep.subr.bf16.mxu0 %v648
    %817 = vmatpush1.bf16.msra.mxu0 %v647
    %818 = vmatprep.subr.bf16.mxu0 %v652
    %819 = vmatpush1.bf16.msra.mxu0 %v651
    %820 = vmatprep.subr.bf16.mxu0 %v656
    %821 = vmatpush1.bf16.msra.mxu0 %v655
    %822 = vmatprep.subr.bf16.mxu0 %v660
    %823 = vmatpush1.bf16.msra.mxu0 %v659
    %824 = vmatprep.subr.bf16.mxu0 %v664
    %825 = vmatpush1.bf16.msra.mxu0 %v663
    %826 = vmatprep.subr.bf16.mxu0 0
    %827 = vmatpush1.bf16.msra.mxu0 0
    %828 = vmatprep.subr.bf16.mxu0 0
    %829 = vmatpush1.bf16.msra.mxu0 0
    %830 = vmatprep.subr.bf16.mxu0 0
    %831 = vmatpush1.bf16.msra.mxu0 0
    %832 = vmatprep.subr.bf16.mxu0 0
    %833 = vmatpush1.bf16.msra.mxu0 0
    %834 = vmatprep.subr.bf16.mxu0 0
    %835 = vmatpush1.bf16.msra.mxu0 0
    %836 = vmatprep.subr.bf16.mxu0 0
    %837 = vmatpush1.bf16.msra.mxu0 0
    %838 = vmatprep.subr.bf16.mxu0 0
    %839 = vmatpush1.bf16.msra.mxu0 0
    %840 = vmatprep.subr.bf16.mxu0 0
    %841 = vmatpush1.bf16.msra.mxu0 0
    %842 = vmatprep.mubr.bf16.mxu0 0
    %843 = vmatmul.mubr.bf16.gmra.mrb[0].mxu0 %v481
    %v844 = vpop.f32.mrb[0].mxu0
    %v845 = vadd.f32 %v532, %v844
    %v846 = vpop.f32.mrb[0].mxu0
    %v847 = vadd.f32 %v536, %v846
    %v848 = vpop.f32.mrb[0].mxu0
    %v849 = vadd.f32 %v532, %v848
    %v850 = vpop.f32.mrb[0].mxu0
    %v851 = vadd.f32 %v536, %v850
    %852 = vmatprep.mubr.bf16.mxu0 0
    %853 = vmatmul.mubr.bf16.gmra.mrb[0].mxu0 %v482
    %v854 = vpop.f32.mrb[0].mxu0
    %v855 = vadd.f32 %v532, %v854
    %v856 = vpop.f32.mrb[0].mxu0
    %v857 = vadd.f32 %v536, %v856
    %v858 = vpop.f32.mrb[0].mxu0
    %v859 = vadd.f32 %v532, %v858
    %v860 = vpop.f32.mrb[0].mxu0
    %v861 = vadd.f32 %v536, %v860
    %862 = vmatprep.mubr.bf16.mxu0 0
    %863 = vmatmul.mubr.bf16.gmra.mrb[0].mxu0 %v483
    %v864 = vpop.f32.mrb[0].mxu0
    %v865 = vadd.f32 %v532, %v864
    %v866 = vpop.f32.mrb[0].mxu0
    %v867 = vadd.f32 %v536, %v866
    %v868 = vpop.f32.mrb[0].mxu0
    %v869 = vadd.f32 %v532, %v868
    %v870 = vpop.f32.mrb[0].mxu0
    %v871 = vadd.f32 %v536, %v870
    %872 = vmatprep.mubr.bf16.mxu0 0
    %873 = vmatmul.mubr.bf16.gmra.mrb[0].mxu0 %v484
    %v874 = vpop.f32.mrb[0].mxu0
    %v875 = vadd.f32 %v532, %v874
    %v876 = vpop.f32.mrb[0].mxu0
    %v877 = vadd.f32 %v536, %v876
    %v878 = vpop.f32.mrb[0].mxu0
    %v879 = vadd.f32 %v532, %v878
    %v880 = vpop.f32.mrb[0].mxu0
    %v881 = vadd.f32 %v536, %v880
    %882 = vmatprep.mubr.bf16.mxu0 0
    %883 = vmatmul.mubr.bf16.gmra.mrb[0].mxu0 %v485
    %v884 = vpop.f32.mrb[0].mxu0
    %v885 = vadd.f32 %v532, %v884
    %v886 = vpop.f32.mrb[0].mxu0
    %v887 = vadd.f32 %v536, %v886
    %v888 = vpop.f32.mrb[0].mxu0
    %v889 = vadd.f32 %v532, %v888
    %v890 = vpop.f32.mrb[0].mxu0
    %v891 = vadd.f32 %v536, %v890
    %892 = vmatprep.mubr.bf16.mxu0 0
    %893 = vmatmul.mubr.bf16.gmra.mrb[0].mxu0 %v486
    %v894 = vpop.f32.mrb[0].mxu0
    %v895 = vadd.f32 %v532, %v894
    %v896 = vpop.f32.mrb[0].mxu0
    %v897 = vadd.f32 %v536, %v896
    %v898 = vpop.f32.mrb[0].mxu0
    %v899 = vadd.f32 %v532, %v898
    %v900 = vpop.f32.mrb[0].mxu0
    %v901 = vadd.f32 %v536, %v900
    %902 = vmatprep.mubr.bf16.mxu0 0
    %903 = vmatmul.mubr.bf16.gmra.mrb[0].mxu0 %v487
    %v904 = vpop.f32.mrb[0].mxu0
    %v905 = vadd.f32 %v532, %v904
    %v906 = vpop.f32.mrb[0].mxu0
    %v907 = vadd.f32 %v536, %v906
    %v908 = vpop.f32.mrb[0].mxu0
    %v909 = vadd.f32 %v532, %v908
    %v910 = vpop.f32.mrb[0].mxu0
    %v911 = vadd.f32 %v536, %v910
    %912 = vmatprep.mubr.bf16.mxu0 0
    %913 = vmatmul.mubr.bf16.gmra.mrb[0].mxu0 %v488
    %v914 = vpop.f32.mrb[0].mxu0
    %v915 = vadd.f32 %v532, %v914
    %v916 = vpop.f32.mrb[0].mxu0
    %v917 = vadd.f32 %v536, %v916
    %v918 = vpop.f32.mrb[0].mxu0
    %v919 = vadd.f32 %v532, %v918
    %v920 = vpop.f32.mrb[0].mxu0
    %v921 = vadd.f32 %v536, %v920
    %922 = vdwg.mxu0
    %v923 = vmax.f32 %v732, 0.0
    %v924 = vmax.f32 %v734, 0.0
    %v925 = vmax.f32 %v845, 0.0
    %v926 = vmax.f32 %v847, 0.0
    %v927 = vmax.f32 %v736, 0.0
    %v928 = vmax.f32 %v738, 0.0
    %v929 = vmax.f32 %v849, 0.0
    %v930 = vmax.f32 %v851, 0.0
    %v931 = vmax.f32 %v742, 0.0
    %v932 = vmax.f32 %v744, 0.0
    %v933 = vmax.f32 %v855, 0.0
    %v934 = vmax.f32 %v857, 0.0
    %v935 = vmax.f32 %v746, 0.0
    %v936 = vmax.f32 %v748, 0.0
    %v937 = vmax.f32 %v859, 0.0
    %v938 = vmax.f32 %v861, 0.0
    %v939 = vmax.f32 %v752, 0.0
    %v940 = vmax.f32 %v754, 0.0
    %v941 = vmax.f32 %v865, 0.0
    %v942 = vmax.f32 %v867, 0.0
    %v943 = vmax.f32 %v756, 0.0
    %v944 = vmax.f32 %v758, 0.0
    %v945 = vmax.f32 %v869, 0.0
    %v946 = vmax.f32 %v871, 0.0
    %v947 = vmax.f32 %v762, 0.0
    %v948 = vmax.f32 %v764, 0.0
    %v949 = vmax.f32 %v875, 0.0
    %v950 = vmax.f32 %v877, 0.0
    %v951 = vmax.f32 %v766, 0.0
    %v952 = vmax.f32 %v768, 0.0
    %v953 = vmax.f32 %v879, 0.0
    %v954 = vmax.f32 %v881, 0.0
    %v955 = vmax.f32 %v772, 0.0
    %v956 = vmax.f32 %v774, 0.0
    %v957 = vmax.f32 %v885, 0.0
    %v958 = vmax.f32 %v887, 0.0
    %v959 = vmax.f32 %v776, 0.0
    %v960 = vmax.f32 %v778, 0.0
    %v961 = vmax.f32 %v889, 0.0
    %v962 = vmax.f32 %v891, 0.0
    %v963 = vmax.f32 %v782, 0.0
    %v964 = vmax.f32 %v784, 0.0
    %v965 = vmax.f32 %v895, 0.0
    %v966 = vmax.f32 %v897, 0.0
    %v967 = vmax.f32 %v786, 0.0
    %v968 = vmax.f32 %v788, 0.0
    %v969 = vmax.f32 %v899, 0.0
    %v970 = vmax.f32 %v901, 0.0
    %v971 = vmax.f32 %v792, 0.0
    %v972 = vmax.f32 %v794, 0.0
    %v973 = vmax.f32 %v905, 0.0
    %v974 = vmax.f32 %v907, 0.0
    %v975 = vmax.f32 %v796, 0.0
    %v976 = vmax.f32 %v798, 0.0
    %v977 = vmax.f32 %v909, 0.0
    %v978 = vmax.f32 %v911, 0.0
    %v979 = vmax.f32 %v802, 0.0
    %v980 = vmax.f32 %v804, 0.0
    %v981 = vmax.f32 %v915, 0.0
    %v982 = vmax.f32 %v917, 0.0
    %v983 = vmax.f32 %v806, 0.0
    %v984 = vmax.f32 %v808, 0.0
    %v985 = vmax.f32 %v919, 0.0
    %v986 = vmax.f32 %v921, 0.0
    %v987 = vld [vmem:[%s3] sm:$0xf]
    %v988 = vld [vmem:[%s3 + $0x4] sm:$0xf]
    %v989 = vpack.c.bf16 %v927, %v923
    %v990 = vpack.c.bf16 %v928, %v924
    %v991 = vpack.c.bf16 %v929, %v925
    %v992 = vpack.c.bf16 %v930, %v926
    %v993 = vpack.c.bf16 %v935, %v931
    %v994 = vpack.c.bf16 %v936, %v932
    %v995 = vpack.c.bf16 %v937, %v933
    %v996 = vpack.c.bf16 %v938, %v934
    %v997 = vpack.c.bf16 %v943, %v939
    %v998 = vpack.c.bf16 %v944, %v940
    %v999 = vpack.c.bf16 %v945, %v941
    %v1000 = vpack.c.bf16 %v946, %v942
    %v1001 = vpack.c.bf16 %v951, %v947
    %v1002 = vpack.c.bf16 %v952, %v948
    %v1003 = vpack.c.bf16 %v953, %v949
    %v1004 = vpack.c.bf16 %v954, %v950
    %v1005 = vpack.c.bf16 %v959, %v955
    %v1006 = vpack.c.bf16 %v960, %v956
    %v1007 = vpack.c.bf16 %v961, %v957
    %v1008 = vpack.c.bf16 %v962, %v958
    %v1009 = vpack.c.bf16 %v967, %v963
    %v1010 = vpack.c.bf16 %v968, %v964
    %v1011 = vpack.c.bf16 %v969, %v965
    %v1012 = vpack.c.bf16 %v970, %v966
    %v1013 = vpack.c.bf16 %v975, %v971
    %v1014 = vpack.c.bf16 %v976, %v972
    %v1015 = vpack.c.bf16 %v977, %v973
    %v1016 = vpack.c.bf16 %v978, %v974
    %v1017 = vpack.c.bf16 %v983, %v979
    %v1018 = vpack.c.bf16 %v984, %v980
    %v1019 = vpack.c.bf16 %v985, %v981
    %v1020 = vpack.c.bf16 %v986, %v982
    %v1023 = vunpack.c.l.b16 %v987
    %v1024 = vunpack.c.l.b16 %v988
    %v1025 = vpack.c.b16 %v1024, %v1023
    %1027 = vmatprep.subr.bf16.mxu0 %v990
    %1028 = vmatpush1.bf16.msra.mxu0 %v989
    %1029 = vmatprep.subr.bf16.mxu0 %v994
    %1030 = vmatpush1.bf16.msra.mxu0 %v993
    %1031 = vmatprep.subr.bf16.mxu0 %v998
    %1032 = vmatpush1.bf16.msra.mxu0 %v997
    %1033 = vmatprep.subr.bf16.mxu0 %v1002
    %1034 = vmatpush1.bf16.msra.mxu0 %v1001
    %1035 = vmatprep.subr.bf16.mxu0 %v1006
    %1036 = vmatpush1.bf16.msra.mxu0 %v1005
    %1037 = vmatprep.subr.bf16.mxu0 %v1010
    %1038 = vmatpush1.bf16.msra.mxu0 %v1009
    %1039 = vmatprep.subr.bf16.mxu0 %v1014
    %1040 = vmatpush1.bf16.msra.mxu0 %v1013
    %1041 = vmatprep.subr.bf16.mxu0 %v1018
    %1042 = vmatpush1.bf16.msra.mxu0 %v1017
    %1043 = vmatprep.subr.bf16.mxu0 0
    %1044 = vmatpush1.bf16.msra.mxu0 0
    %1045 = vmatprep.subr.bf16.mxu0 0
    %1046 = vmatpush1.bf16.msra.mxu0 0
    %1047 = vmatprep.subr.bf16.mxu0 0
    %1048 = vmatpush1.bf16.msra.mxu0 0
    %1049 = vmatprep.subr.bf16.mxu0 0
    %1050 = vmatpush1.bf16.msra.mxu0 0
    %1051 = vmatprep.subr.bf16.mxu0 0
    %1052 = vmatpush1.bf16.msra.mxu0 0
    %1053 = vmatprep.subr.bf16.mxu0 0
    %1054 = vmatpush1.bf16.msra.mxu0 0
    %1055 = vmatprep.subr.bf16.mxu0 0
    %1056 = vmatpush1.bf16.msra.mxu0 0
    %1057 = vmatprep.subr.bf16.mxu0 0
    %1058 = vmatpush1.bf16.msra.mxu0 0
    %1059 = vmatprep.mubr.bf16.mxu0 0
    %1060 = vmatmul.mubr.bf16.gmra.mrb[0].mxu0 %v1025
    %v1061 = vpop.f32.mrb[0].mxu0
    %v1062 = vadd.f32 0.0, %v1061
    %v1063 = vpop.f32.mrb[0].mxu0
    %v1064 = vadd.f32 0.0, %v1063
    %v1065 = vpop.f32.mrb[0].mxu0
    %v1066 = vadd.f32 0.0, %v1065
    %v1067 = vpop.f32.mrb[0].mxu0
    %v1068 = vadd.f32 0.0, %v1067
    %1069 = vdwg.mxu0
    %1070 = vmatprep.subr.bf16.mxu0 %v992
    %1071 = vmatpush1.bf16.msra.mxu0 %v991
    %1072 = vmatprep.subr.bf16.mxu0 %v996
    %1073 = vmatpush1.bf16.msra.mxu0 %v995
    %1074 = vmatprep.subr.bf16.mxu0 %v1000
    %1075 = vmatpush1.bf16.msra.mxu0 %v999
    %1076 = vmatprep.subr.bf16.mxu0 %v1004
    %1077 = vmatpush1.bf16.msra.mxu0 %v1003
    %1078 = vmatprep.subr.bf16.mxu0 %v1008
    %1079 = vmatpush1.bf16.msra.mxu0 %v1007
    %1080 = vmatprep.subr.bf16.mxu0 %v1012
    %1081 = vmatpush1.bf16.msra.mxu0 %v1011
    %1082 = vmatprep.subr.bf16.mxu0 %v1016
    %1083 = vmatpush1.bf16.msra.mxu0 %v1015
    %1084 = vmatprep.subr.bf16.mxu0 %v1020
    %1085 = vmatpush1.bf16.msra.mxu0 %v1019
    %1086 = vmatprep.subr.bf16.mxu0 0
    %1087 = vmatpush1.bf16.msra.mxu0 0
    %1088 = vmatprep.subr.bf16.mxu0 0
    %1089 = vmatpush1.bf16.msra.mxu0 0
    %1090 = vmatprep.subr.bf16.mxu0 0
    %1091 = vmatpush1.bf16.msra.mxu0 0
    %1092 = vmatprep.subr.bf16.mxu0 0
    %1093 = vmatpush1.bf16.msra.mxu0 0
    %1094 = vmatprep.subr.bf16.mxu0 0
    %1095 = vmatpush1.bf16.msra.mxu0 0
    %1096 = vmatprep.subr.bf16.mxu0 0
    %1097 = vmatpush1.bf16.msra.mxu0 0
    %1098 = vmatprep.subr.bf16.mxu0 0
    %1099 = vmatpush1.bf16.msra.mxu0 0
    %1100 = vmatprep.subr.bf16.mxu0 0
    %1101 = vmatpush1.bf16.msra.mxu0 0
    %1102 = vmatprep.mubr.bf16.mxu0 0
    %1103 = vmatmul.mubr.bf16.gmra.mrb[0].mxu0 %v1025
    %v1104 = vpop.f32.mrb[0].mxu0
    %v1105 = vadd.f32 0.0, %v1104
    %v1106 = vpop.f32.mrb[0].mxu0
    %v1107 = vadd.f32 0.0, %v1106
    %v1108 = vpop.f32.mrb[0].mxu0
    %v1109 = vadd.f32 0.0, %v1108
    %v1110 = vpop.f32.mrb[0].mxu0
    %v1111 = vadd.f32 0.0, %v1110
    %1112 = vdwg.mxu0
    %v1113 = vunpack.c.l.bf16 %v987
    %v1114 = vunpack.c.l.bf16 %v988
    %1115 = vadd.xlane.f32.xlu0 %v1113
    %v1116 = vpop.xlane.xlu0 %1115
    %1117 = vadd.xlane.f32.xlu0 %v1114
    %v1118 = vpop.xlane.xlu0 %1117
    %v1119 = vmax.f32 %v1116, 1.0
    %v1120 = vmax.f32 %v1118, 1.0
    %v1121 = vrcp.pop %v1119
    %v1122 = vmul.f32 %v1062, %v1121
    %v1123 = vmul.f32 %v1064, %v1121
    %v1124 = vmul.f32 %v1105, %v1121
    %v1125 = vmul.f32 %v1107, %v1121
    %v1126 = vrcp.pop %v1120
    %v1127 = vmul.f32 %v1066, %v1126
    %v1128 = vmul.f32 %v1068, %v1126
    %v1129 = vmul.f32 %v1109, %v1126
    %v1130 = vmul.f32 %v1111, %v1126
    %v1131 = vld [vmem:[#allocation8] sm:$0xff]
    %v1132 = vld [vmem:[#allocation8 + $0x8] sm:$0xff]
    %v1133 = vld [vmem:[#allocation8 + $0x10] sm:$0xff]
    %v1134 = vld [vmem:[#allocation8 + $0x18] sm:$0xff]
    %v1135 = vld [vmem:[#allocation8 + $0x20] sm:$0xff]
    %v1136 = vld [vmem:[#allocation8 + $0x28] sm:$0xff]
    %v1137 = vld [vmem:[#allocation8 + $0x30] sm:$0xff]
    %v1138 = vld [vmem:[#allocation8 + $0x38] sm:$0xff]
    %v1139 = vld [vmem:[#allocation8 + $0x40] sm:$0xff]
    %v1140 = vld [vmem:[#allocation8 + $0x48] sm:$0xff]
    %v1141 = vld [vmem:[#allocation8 + $0x50] sm:$0xff]
    %v1142 = vld [vmem:[#allocation8 + $0x58] sm:$0xff]
    %v1143 = vld [vmem:[#allocation8 + $0x60] sm:$0xff]
    %v1144 = vld [vmem:[#allocation8 + $0x68] sm:$0xff]
    %v1145 = vld [vmem:[#allocation8 + $0x70] sm:$0xff]
    %v1146 = vld [vmem:[#allocation8 + $0x78] sm:$0xff]
    %1148 = vset.pattern.permute.xlu0 0
    %1149 = vperm.xlu0 %1148, %v1131
    %v1150 = vpop.permute.xlu0 %1149
    %1153 = vset.pattern.permute.xlu0 0
    %1154 = vperm.xlu0 %1153, %v1132
    %v1155 = vpop.permute.xlu0 %1154
    %1158 = vset.pattern.permute.xlu0 0
    %1159 = vperm.xlu0 %1158, %v1133
    %v1160 = vpop.permute.xlu0 %1159
    %1163 = vset.pattern.permute.xlu0 0
    %1164 = vperm.xlu0 %1163, %v1134
    %v1165 = vpop.permute.xlu0 %1164
    %1168 = vset.pattern.permute.xlu0 0
    %1169 = vperm.xlu0 %1168, %v1135
    %v1170 = vpop.permute.xlu0 %1169
    %1173 = vset.pattern.permute.xlu0 0
    %1174 = vperm.xlu0 %1173, %v1136
    %v1175 = vpop.permute.xlu0 %1174
    %1178 = vset.pattern.permute.xlu0 0
    %1179 = vperm.xlu0 %1178, %v1137
    %v1180 = vpop.permute.xlu0 %1179
    %1183 = vset.pattern.permute.xlu0 0
    %1184 = vperm.xlu0 %1183, %v1138
    %v1185 = vpop.permute.xlu0 %1184
    %1188 = vset.pattern.permute.xlu0 0
    %1189 = vperm.xlu0 %1188, %v1139
    %v1190 = vpop.permute.xlu0 %1189
    %1193 = vset.pattern.permute.xlu0 0
    %1194 = vperm.xlu0 %1193, %v1140
    %v1195 = vpop.permute.xlu0 %1194
    %1198 = vset.pattern.permute.xlu0 0
    %1199 = vperm.xlu0 %1198, %v1141
    %v1200 = vpop.permute.xlu0 %1199
    %1203 = vset.pattern.permute.xlu0 0
    %1204 = vperm.xlu0 %1203, %v1142
    %v1205 = vpop.permute.xlu0 %1204
    %1208 = vset.pattern.permute.xlu0 0
    %1209 = vperm.xlu0 %1208, %v1143
    %v1210 = vpop.permute.xlu0 %1209
    %1213 = vset.pattern.permute.xlu0 0
    %1214 = vperm.xlu0 %1213, %v1144
    %v1215 = vpop.permute.xlu0 %1214
    %1218 = vset.pattern.permute.xlu0 0
    %1219 = vperm.xlu0 %1218, %v1145
    %v1220 = vpop.permute.xlu0 %1219
    %1223 = vset.pattern.permute.xlu0 0
    %1224 = vperm.xlu0 %1223, %v1146
    %v1225 = vpop.permute.xlu0 %1224
    %v1227 = vlaneseq
    %v1228 = vshrl.u32 %v1227, 7
    %v1229 = vsub.s32 2, %v1228
    %v1230 = vrot.slane %v127, %v1229
    %v1231 = vsub.f32 %v1150, %v1230
    %v1232 = vsub.f32 %v1155, %v1230
    %v1233 = vsub.f32 %v1160, %v1230
    %v1234 = vsub.f32 %v1165, %v1230
    %v1235 = vsub.f32 %v1170, %v1230
    %v1236 = vsub.f32 %v1175, %v1230
    %v1237 = vsub.f32 %v1180, %v1230
    %v1238 = vsub.f32 %v1185, %v1230
    %v1239 = vsub.f32 %v1190, %v1230
    %v1240 = vsub.f32 %v1195, %v1230
    %v1241 = vsub.f32 %v1200, %v1230
    %v1242 = vsub.f32 %v1205, %v1230
    %v1243 = vsub.f32 %v1210, %v1230
    %v1244 = vsub.f32 %v1215, %v1230
    %v1245 = vsub.f32 %v1220, %v1230
    %v1246 = vsub.f32 %v1225, %v1230
    %1247 = vset.pattern.permute.xlu0 1
    %1248 = vperm.xlu0 %1247, %v1131
    %v1249 = vpop.permute.xlu0 %1248
    %1251 = vset.pattern.permute.xlu0 1
    %1252 = vperm.xlu0 %1251, %v1132
    %v1253 = vpop.permute.xlu0 %1252
    %1255 = vset.pattern.permute.xlu0 1
    %1256 = vperm.xlu0 %1255, %v1133
    %v1257 = vpop.permute.xlu0 %1256
    %1259 = vset.pattern.permute.xlu0 1
    %1260 = vperm.xlu0 %1259, %v1134
    %v1261 = vpop.permute.xlu0 %1260
    %1263 = vset.pattern.permute.xlu0 1
    %1264 = vperm.xlu0 %1263, %v1135
    %v1265 = vpop.permute.xlu0 %1264
    %1267 = vset.pattern.permute.xlu0 1
    %1268 = vperm.xlu0 %1267, %v1136
    %v1269 = vpop.permute.xlu0 %1268
    %1271 = vset.pattern.permute.xlu0 1
    %1272 = vperm.xlu0 %1271, %v1137
    %v1273 = vpop.permute.xlu0 %1272
    %1275 = vset.pattern.permute.xlu0 1
    %1276 = vperm.xlu0 %1275, %v1138
    %v1277 = vpop.permute.xlu0 %1276
    %1279 = vset.pattern.permute.xlu0 1
    %1280 = vperm.xlu0 %1279, %v1139
    %v1281 = vpop.permute.xlu0 %1280
    %1283 = vset.pattern.permute.xlu0 1
    %1284 = vperm.xlu0 %1283, %v1140
    %v1285 = vpop.permute.xlu0 %1284
    %1287 = vset.pattern.permute.xlu0 1
    %1288 = vperm.xlu0 %1287, %v1141
    %v1289 = vpop.permute.xlu0 %1288
    %1291 = vset.pattern.permute.xlu0 1
    %1292 = vperm.xlu0 %1291, %v1142
    %v1293 = vpop.permute.xlu0 %1292
    %1295 = vset.pattern.permute.xlu0 1
    %1296 = vperm.xlu0 %1295, %v1143
    %v1297 = vpop.permute.xlu0 %1296
    %1299 = vset.pattern.permute.xlu0 1
    %1300 = vperm.xlu0 %1299, %v1144
    %v1301 = vpop.permute.xlu0 %1300
    %1303 = vset.pattern.permute.xlu0 1
    %1304 = vperm.xlu0 %1303, %v1145
    %v1305 = vpop.permute.xlu0 %1304
    %1307 = vset.pattern.permute.xlu0 1
    %1308 = vperm.xlu0 %1307, %v1146
    %v1309 = vpop.permute.xlu0 %1308
    %v1311 = vlaneseq
    %v1312 = vshrl.u32 %v1311, 7
    %v1313 = vsub.s32 3, %v1312
    %v1314 = vrot.slane %v127, %v1313
    %v1315 = vsub.f32 %v1249, %v1314
    %v1316 = vsub.f32 %v1253, %v1314
    %v1317 = vsub.f32 %v1257, %v1314
    %v1318 = vsub.f32 %v1261, %v1314
    %v1319 = vsub.f32 %v1265, %v1314
    %v1320 = vsub.f32 %v1269, %v1314
    %v1321 = vsub.f32 %v1273, %v1314
    %v1322 = vsub.f32 %v1277, %v1314
    %v1323 = vsub.f32 %v1281, %v1314
    %v1324 = vsub.f32 %v1285, %v1314
    %v1325 = vsub.f32 %v1289, %v1314
    %v1326 = vsub.f32 %v1293, %v1314
    %v1327 = vsub.f32 %v1297, %v1314
    %v1328 = vsub.f32 %v1301, %v1314
    %v1329 = vsub.f32 %v1305, %v1314
    %v1330 = vsub.f32 %v1309, %v1314
    %v1331 = vmul.f32 %v1231, %v1231
    %v1332 = vmul.f32 %v1232, %v1232
    %v1333 = vmul.f32 %v1233, %v1233
    %v1334 = vmul.f32 %v1234, %v1234
    %v1335 = vmul.f32 %v1235, %v1235
    %v1336 = vmul.f32 %v1236, %v1236
    %v1337 = vmul.f32 %v1237, %v1237
    %v1338 = vmul.f32 %v1238, %v1238
    %v1339 = vmul.f32 %v1239, %v1239
    %v1340 = vmul.f32 %v1240, %v1240
    %v1341 = vmul.f32 %v1241, %v1241
    %v1342 = vmul.f32 %v1242, %v1242
    %v1343 = vmul.f32 %v1243, %v1243
    %v1344 = vmul.f32 %v1244, %v1244
    %v1345 = vmul.f32 %v1245, %v1245
    %v1346 = vmul.f32 %v1246, %v1246
    %v1347 = vmul.f32 %v1315, %v1315
    %v1348 = vmul.f32 %v1316, %v1316
    %v1349 = vmul.f32 %v1317, %v1317
    %v1350 = vmul.f32 %v1318, %v1318
    %v1351 = vmul.f32 %v1319, %v1319
    %v1352 = vmul.f32 %v1320, %v1320
    %v1353 = vmul.f32 %v1321, %v1321
    %v1354 = vmul.f32 %v1322, %v1322
    %v1355 = vmul.f32 %v1323, %v1323
    %v1356 = vmul.f32 %v1324, %v1324
    %v1357 = vmul.f32 %v1325, %v1325
    %v1358 = vmul.f32 %v1326, %v1326
    %v1359 = vmul.f32 %v1327, %v1327
    %v1360 = vmul.f32 %v1328, %v1328
    %v1361 = vmul.f32 %v1329, %v1329
    %v1362 = vmul.f32 %v1330, %v1330
    %v1363 = vadd.f32 %v1331, %v1347
    %v1364 = vadd.f32 %v1332, %v1348
    %v1365 = vadd.f32 %v1333, %v1349
    %v1366 = vadd.f32 %v1334, %v1350
    %v1367 = vadd.f32 %v1335, %v1351
    %v1368 = vadd.f32 %v1336, %v1352
    %v1369 = vadd.f32 %v1337, %v1353
    %v1370 = vadd.f32 %v1338, %v1354
    %v1371 = vadd.f32 %v1339, %v1355
    %v1372 = vadd.f32 %v1340, %v1356
    %v1373 = vadd.f32 %v1341, %v1357
    %v1374 = vadd.f32 %v1342, %v1358
    %v1375 = vadd.f32 %v1343, %v1359
    %v1376 = vadd.f32 %v1344, %v1360
    %v1377 = vadd.f32 %v1345, %v1361
    %v1378 = vadd.f32 %v1346, %v1362
    %v1379 = vsub.f32 0.0, %v1363
    %v1380 = vsub.f32 0.0, %v1364
    %v1381 = vsub.f32 0.0, %v1365
    %v1382 = vsub.f32 0.0, %v1366
    %v1383 = vsub.f32 0.0, %v1367
    %v1384 = vsub.f32 0.0, %v1368
    %v1385 = vsub.f32 0.0, %v1369
    %v1386 = vsub.f32 0.0, %v1370
    %v1387 = vsub.f32 0.0, %v1371
    %v1388 = vsub.f32 0.0, %v1372
    %v1389 = vsub.f32 0.0, %v1373
    %v1390 = vsub.f32 0.0, %v1374
    %v1391 = vsub.f32 0.0, %v1375
    %v1392 = vsub.f32 0.0, %v1376
    %v1393 = vsub.f32 0.0, %v1377
    %v1394 = vsub.f32 0.0, %v1378
    %v1395 = vlaneseq
    %v1396 = vshrl.u32 %v1395, 7
    %v1397 = vsub.s32 4, %v1396
    %v1398 = vrot.slane %v127, %v1397
    %v1399 = vmul.f32 %v1379, %v1398
    %v1400 = vmul.f32 %v1380, %v1398
    %v1401 = vmul.f32 %v1381, %v1398
    %v1402 = vmul.f32 %v1382, %v1398
    %v1403 = vmul.f32 %v1383, %v1398
    %v1404 = vmul.f32 %v1384, %v1398
    %v1405 = vmul.f32 %v1385, %v1398
    %v1406 = vmul.f32 %v1386, %v1398
    %v1407 = vmul.f32 %v1387, %v1398
    %v1408 = vmul.f32 %v1388, %v1398
    %v1409 = vmul.f32 %v1389, %v1398
    %v1410 = vmul.f32 %v1390, %v1398
    %v1411 = vmul.f32 %v1391, %v1398
    %v1412 = vmul.f32 %v1392, %v1398
    %v1413 = vmul.f32 %v1393, %v1398
    %v1414 = vmul.f32 %v1394, %v1398
    %v1415 = vmul.f32 %v1399, 1.442695
    %v1416 = vpow.pop %v1415
    %v1417 = vmul.f32 %v1400, 1.442695
    %v1418 = vpow.pop %v1417
    %v1419 = vmul.f32 %v1401, 1.442695
    %v1420 = vpow.pop %v1419
    %v1421 = vmul.f32 %v1402, 1.442695
    %v1422 = vpow.pop %v1421
    %v1423 = vmul.f32 %v1403, 1.442695
    %v1424 = vpow.pop %v1423
    %v1425 = vmul.f32 %v1404, 1.442695
    %v1426 = vpow.pop %v1425
    %v1427 = vmul.f32 %v1405, 1.442695
    %v1428 = vpow.pop %v1427
    %v1429 = vmul.f32 %v1406, 1.442695
    %v1430 = vpow.pop %v1429
    %v1431 = vmul.f32 %v1407, 1.442695
    %v1432 = vpow.pop %v1431
    %v1433 = vmul.f32 %v1408, 1.442695
    %v1434 = vpow.pop %v1433
    %v1435 = vmul.f32 %v1409, 1.442695
    %v1436 = vpow.pop %v1435
    %v1437 = vmul.f32 %v1410, 1.442695
    %v1438 = vpow.pop %v1437
    %v1439 = vmul.f32 %v1411, 1.442695
    %v1440 = vpow.pop %v1439
    %v1441 = vmul.f32 %v1412, 1.442695
    %v1442 = vpow.pop %v1441
    %v1443 = vmul.f32 %v1413, 1.442695
    %v1444 = vpow.pop %v1443
    %v1445 = vmul.f32 %v1414, 1.442695
    %v1446 = vpow.pop %v1445
    %v1447 = vld [vmem:[%s5] sm:$0xf]
    %v1448 = vld [vmem:[%s5 + $0x4] sm:$0xf]
    %v1449 = vpack.c.bf16 %v1418, %v1416
    %v1450 = vpack.c.bf16 %v1422, %v1420
    %v1451 = vpack.c.bf16 %v1426, %v1424
    %v1452 = vpack.c.bf16 %v1430, %v1428
    %v1453 = vpack.c.bf16 %v1434, %v1432
    %v1454 = vpack.c.bf16 %v1438, %v1436
    %v1455 = vpack.c.bf16 %v1442, %v1440
    %v1456 = vpack.c.bf16 %v1446, %v1444
    %v1459 = vunpack.c.l.b16 %v1447
    %v1460 = vunpack.c.l.b16 %v1448
    %v1461 = vpack.c.b16 %v1460, %v1459
    %1463 = vmatprep.subr.bf16.mxu0 0
    %1464 = vmatpush1.bf16.msra.mxu0 %v1449
    %1465 = vmatprep.subr.bf16.mxu0 0
    %1466 = vmatpush1.bf16.msra.mxu0 %v1450
    %1467 = vmatprep.subr.bf16.mxu0 0
    %1468 = vmatpush1.bf16.msra.mxu0 %v1451
    %1469 = vmatprep.subr.bf16.mxu0 0
    %1470 = vmatpush1.bf16.msra.mxu0 %v1452
    %1471 = vmatprep.subr.bf16.mxu0 0
    %1472 = vmatpush1.bf16.msra.mxu0 %v1453
    %1473 = vmatprep.subr.bf16.mxu0 0
    %1474 = vmatpush1.bf16.msra.mxu0 %v1454
    %1475 = vmatprep.subr.bf16.mxu0 0
    %1476 = vmatpush1.bf16.msra.mxu0 %v1455
    %1477 = vmatprep.subr.bf16.mxu0 0
    %1478 = vmatpush1.bf16.msra.mxu0 %v1456
    %1479 = vmatprep.subr.bf16.mxu0 0
    %1480 = vmatpush1.bf16.msra.mxu0 0
    %1481 = vmatprep.subr.bf16.mxu0 0
    %1482 = vmatpush1.bf16.msra.mxu0 0
    %1483 = vmatprep.subr.bf16.mxu0 0
    %1484 = vmatpush1.bf16.msra.mxu0 0
    %1485 = vmatprep.subr.bf16.mxu0 0
    %1486 = vmatpush1.bf16.msra.mxu0 0
    %1487 = vmatprep.subr.bf16.mxu0 0
    %1488 = vmatpush1.bf16.msra.mxu0 0
    %1489 = vmatprep.subr.bf16.mxu0 0
    %1490 = vmatpush1.bf16.msra.mxu0 0
    %1491 = vmatprep.subr.bf16.mxu0 0
    %1492 = vmatpush1.bf16.msra.mxu0 0
    %1493 = vmatprep.subr.bf16.mxu0 0
    %1494 = vmatpush1.bf16.msra.mxu0 0
    %1495 = vmatprep.mubr.bf16.mxu0 0
    %1496 = vmatmul.mubr.bf16.gmra.mrb[0].mxu0 %v1461
    %v1497 = vpop.f32.mrb[0].mxu0
    %v1498 = vadd.f32 0.0, %v1497
    %v1499 = vpop.f32.mrb[0].mxu0
    %v1500 = vpop.f32.mrb[0].mxu0
    %v1501 = vadd.f32 0.0, %v1500
    %v1502 = vpop.f32.mrb[0].mxu0
    %1503 = vdwg.mxu0
    %v1504 = vpack.c.bf16 %v1127, %v1122
    %v1505 = vpack.c.bf16 %v1128, %v1123
    %v1506 = vpack.c.bf16 %v1129, %v1124
    %v1507 = vpack.c.bf16 %v1130, %v1125
    %v1508 = vld [vmem:[#allocation10] sm:$0xf]
    %v1509 = vld [vmem:[#allocation10 + $0x4] sm:$0xf]
    %v1510 = vld [vmem:[#allocation10 + $0x8] sm:$0xf]
    %v1511 = vld [vmem:[#allocation10 + $0xc] sm:$0xf]
    %v1512 = vld [vmem:[#allocation10 + $0x10] sm:$0xf]
    %v1513 = vld [vmem:[#allocation10 + $0x14] sm:$0xf]
    %v1514 = vld [vmem:[#allocation10 + $0x18] sm:$0xf]
    %v1515 = vld [vmem:[#allocation10 + $0x1c] sm:$0xf]
    %v1516 = vld [vmem:[#allocation10 + $0x20] sm:$0xf]
    %v1517 = vld [vmem:[#allocation10 + $0x24] sm:$0xf]
    %v1518 = vld [vmem:[#allocation10 + $0x28] sm:$0xf]
    %v1519 = vld [vmem:[#allocation10 + $0x2c] sm:$0xf]
    %v1520 = vld [vmem:[#allocation10 + $0x30] sm:$0xf]
    %v1521 = vld [vmem:[#allocation10 + $0x34] sm:$0xf]
    %v1522 = vld [vmem:[#allocation10 + $0x38] sm:$0xf]
    %v1523 = vld [vmem:[#allocation10 + $0x3c] sm:$0xf]
    %v1524 = vld [vmem:[#allocation10 + $0x40] sm:$0xf]
    %v1525 = vld [vmem:[#allocation10 + $0x44] sm:$0xf]
    %v1526 = vld [vmem:[#allocation10 + $0x48] sm:$0xf]
    %v1527 = vld [vmem:[#allocation10 + $0x4c] sm:$0xf]
    %v1528 = vld [vmem:[#allocation10 + $0x50] sm:$0xf]
    %v1529 = vld [vmem:[#allocation10 + $0x54] sm:$0xf]
    %v1530 = vld [vmem:[#allocation10 + $0x58] sm:$0xf]
    %v1531 = vld [vmem:[#allocation10 + $0x5c] sm:$0xf]
    %v1532 = vld [vmem:[#allocation10 + $0x60] sm:$0xf]
    %v1533 = vld [vmem:[#allocation10 + $0x64] sm:$0xf]
    %v1534 = vld [vmem:[#allocation10 + $0x68] sm:$0xf]
    %v1535 = vld [vmem:[#allocation10 + $0x6c] sm:$0xf]
    %v1536 = vld [vmem:[#allocation10 + $0x70] sm:$0xf]
    %v1537 = vld [vmem:[#allocation10 + $0x74] sm:$0xf]
    %v1538 = vld [vmem:[#allocation10 + $0x78] sm:$0xf]
    %v1539 = vld [vmem:[#allocation10 + $0x7c] sm:$0xf]
    %v1540 = vld [vmem:[#allocation10 + $0x80] sm:$0xf]
    %v1541 = vld [vmem:[#allocation10 + $0x84] sm:$0xf]
    %v1542 = vld [vmem:[#allocation10 + $0x88] sm:$0xf]
    %v1543 = vld [vmem:[#allocation10 + $0x8c] sm:$0xf]
    %v1544 = vld [vmem:[#allocation10 + $0x90] sm:$0xf]
    %v1545 = vld [vmem:[#allocation10 + $0x94] sm:$0xf]
    %v1546 = vld [vmem:[#allocation10 + $0x98] sm:$0xf]
    %v1547 = vld [vmem:[#allocation10 + $0x9c] sm:$0xf]
    %v1548 = vld [vmem:[#allocation10 + $0xa0] sm:$0xf]
    %v1549 = vld [vmem:[#allocation10 + $0xa4] sm:$0xf]
    %v1550 = vld [vmem:[#allocation10 + $0xa8] sm:$0xf]
    %v1551 = vld [vmem:[#allocation10 + $0xac] sm:$0xf]
    %v1552 = vld [vmem:[#allocation10 + $0xb0] sm:$0xf]
    %v1553 = vld [vmem:[#allocation10 + $0xb4] sm:$0xf]
    %v1554 = vld [vmem:[#allocation10 + $0xb8] sm:$0xf]
    %v1555 = vld [vmem:[#allocation10 + $0xbc] sm:$0xf]
    %v1556 = vld [vmem:[#allocation10 + $0xc0] sm:$0xf]
    %v1557 = vld [vmem:[#allocation10 + $0xc4] sm:$0xf]
    %v1558 = vld [vmem:[#allocation10 + $0xc8] sm:$0xf]
    %v1559 = vld [vmem:[#allocation10 + $0xcc] sm:$0xf]
    %v1560 = vld [vmem:[#allocation10 + $0xd0] sm:$0xf]
    %v1561 = vld [vmem:[#allocation10 + $0xd4] sm:$0xf]
    %v1562 = vld [vmem:[#allocation10 + $0xd8] sm:$0xf]
    %v1563 = vld [vmem:[#allocation10 + $0xdc] sm:$0xf]
    %v1564 = vld [vmem:[#allocation10 + $0xe0] sm:$0xf]
    %v1565 = vld [vmem:[#allocation10 + $0xe4] sm:$0xf]
    %v1566 = vld [vmem:[#allocation10 + $0xe8] sm:$0xf]
    %v1567 = vld [vmem:[#allocation10 + $0xec] sm:$0xf]
    %v1568 = vld [vmem:[#allocation10 + $0xf0] sm:$0xf]
    %v1569 = vld [vmem:[#allocation10 + $0xf4] sm:$0xf]
    %v1570 = vld [vmem:[#allocation10 + $0xf8] sm:$0xf]
    %v1571 = vld [vmem:[#allocation10 + $0xfc] sm:$0xf]
    %v1572 = vpack.c.bf16 %v1501, %v1498
    %v1573 = vld [vmem:[#allocation11] sm:$0xf]
    %v1574 = vld [vmem:[#allocation11 + $0x4] sm:$0xf]
    %v1575 = vld [vmem:[#allocation11 + $0x8] sm:$0xf]
    %v1576 = vld [vmem:[#allocation11 + $0xc] sm:$0xf]
    %v1577 = vld [vmem:[#allocation11 + $0x10] sm:$0xf]
    %v1578 = vld [vmem:[#allocation11 + $0x14] sm:$0xf]
    %v1579 = vld [vmem:[#allocation11 + $0x18] sm:$0xf]
    %v1580 = vld [vmem:[#allocation11 + $0x1c] sm:$0xf]
    %v1581 = vld [vmem:[#allocation11 + $0x20] sm:$0xf]
    %v1582 = vld [vmem:[#allocation11 + $0x24] sm:$0xf]
    %v1583 = vld [vmem:[#allocation11 + $0x28] sm:$0xf]
    %v1584 = vld [vmem:[#allocation11 + $0x2c] sm:$0xf]
    %v1585 = vld [vmem:[#allocation11 + $0x30] sm:$0xf]
    %v1586 = vld [vmem:[#allocation11 + $0x34] sm:$0xf]
    %v1587 = vld [vmem:[#allocation11 + $0x38] sm:$0xf]
    %v1588 = vld [vmem:[#allocation11 + $0x3c] sm:$0xf]
    %v1605 = vunpack.c.l.b16 %v1573
    %v1606 = vunpack.c.l.b16 %v1574
    %v1607 = vunpack.c.l.b16 %v1575
    %v1608 = vunpack.c.l.b16 %v1576
    %v1609 = vunpack.c.l.b16 %v1577
    %v1610 = vunpack.c.l.b16 %v1578
    %v1611 = vunpack.c.l.b16 %v1579
    %v1612 = vunpack.c.l.b16 %v1580
    %v1613 = vunpack.c.l.b16 %v1581
    %v1614 = vunpack.c.l.b16 %v1582
    %v1615 = vunpack.c.l.b16 %v1583
    %v1616 = vunpack.c.l.b16 %v1584
    %v1617 = vunpack.c.l.b16 %v1585
    %v1618 = vunpack.c.l.b16 %v1586
    %v1619 = vunpack.c.l.b16 %v1587
    %v1620 = vunpack.c.l.b16 %v1588
    %v1621 = vpack.c.b16 %v1606, %v1605
    %v1622 = vpack.c.b16 %v1608, %v1607
    %v1623 = vpack.c.b16 %v1610, %v1609
    %v1624 = vpack.c.b16 %v1612, %v1611
    %v1625 = vpack.c.b16 %v1614, %v1613
    %v1626 = vpack.c.b16 %v1616, %v1615
    %v1627 = vpack.c.b16 %v1618, %v1617
    %v1628 = vpack.c.b16 %v1620, %v1619
    %1637 = vmatprep.subr.bf16.mxu0 0
    %1638 = vmatpush1.bf16.msra.mxu0 %v1621
    %1639 = vmatprep.subr.bf16.mxu0 0
    %1640 = vmatpush1.bf16.msra.mxu0 %v1622
    %1641 = vmatprep.subr.bf16.mxu0 0
    %1642 = vmatpush1.bf16.msra.mxu0 %v1623
    %1643 = vmatprep.subr.bf16.mxu0 0
    %1644 = vmatpush1.bf16.msra.mxu0 %v1624
    %1645 = vmatprep.subr.bf16.mxu0 0
    %1646 = vmatpush1.bf16.msra.mxu0 %v1625
    %1647 = vmatprep.subr.bf16.mxu0 0
    %1648 = vmatpush1.bf16.msra.mxu0 %v1626
    %1649 = vmatprep.subr.bf16.mxu0 0
    %1650 = vmatpush1.bf16.msra.mxu0 %v1627
    %1651 = vmatprep.subr.bf16.mxu0 0
    %1652 = vmatpush1.bf16.msra.mxu0 %v1628
    %1653 = vmatprep.subr.bf16.mxu0 0
    %1654 = vmatpush1.bf16.msra.mxu0 0
    %1655 = vmatprep.subr.bf16.mxu0 0
    %1656 = vmatpush1.bf16.msra.mxu0 0
    %1657 = vmatprep.subr.bf16.mxu0 0
    %1658 = vmatpush1.bf16.msra.mxu0 0
    %1659 = vmatprep.subr.bf16.mxu0 0
    %1660 = vmatpush1.bf16.msra.mxu0 0
    %1661 = vmatprep.subr.bf16.mxu0 0
    %1662 = vmatpush1.bf16.msra.mxu0 0
    %1663 = vmatprep.subr.bf16.mxu0 0
    %1664 = vmatpush1.bf16.msra.mxu0 0
    %1665 = vmatprep.subr.bf16.mxu0 0
    %1666 = vmatpush1.bf16.msra.mxu0 0
    %1667 = vmatprep.subr.bf16.mxu0 0
    %1668 = vmatpush1.bf16.msra.mxu0 0
    %1669 = vmatprep.mubr.bf16.mxu0 0
    %1670 = vmatmul.mubr.bf16.gmra.mrb[0].mxu0 %v1572
    %v1671 = vpop.f32.mrb[0].mxu0
    %v1672 = vadd.f32 0.0, %v1671
    %v1673 = vpop.f32.mrb[0].mxu0
    %v1674 = vpop.f32.mrb[0].mxu0
    %v1675 = vadd.f32 0.0, %v1674
    %v1676 = vpop.f32.mrb[0].mxu0
    %1677 = vdwg.mxu0
    %v1742 = vunpack.c.l.b16 %v1508
    %v1743 = vunpack.c.l.b16 %v1509
    %v1744 = vunpack.c.l.b16 %v1510
    %v1745 = vunpack.c.l.b16 %v1511
    %v1746 = vunpack.c.l.b16 %v1512
    %v1747 = vunpack.c.l.b16 %v1513
    %v1748 = vunpack.c.l.b16 %v1514
    %v1749 = vunpack.c.l.b16 %v1515
    %v1750 = vunpack.c.l.b16 %v1516
    %v1751 = vunpack.c.l.b16 %v1517
    %v1752 = vunpack.c.l.b16 %v1518
    %v1753 = vunpack.c.l.b16 %v1519
    %v1754 = vunpack.c.l.b16 %v1520
    %v1755 = vunpack.c.l.b16 %v1521
    %v1756 = vunpack.c.l.b16 %v1522
    %v1757 = vunpack.c.l.b16 %v1523
    %v1758 = vunpack.c.l.b16 %v1524
    %v1759 = vunpack.c.l.b16 %v1525
    %v1760 = vunpack.c.l.b16 %v1526
    %v1761 = vunpack.c.l.b16 %v1527
    %v1762 = vunpack.c.l.b16 %v1528
    %v1763 = vunpack.c.l.b16 %v1529
    %v1764 = vunpack.c.l.b16 %v1530
    %v1765 = vunpack.c.l.b16 %v1531
    %v1766 = vunpack.c.l.b16 %v1532
    %v1767 = vunpack.c.l.b16 %v1533
    %v1768 = vunpack.c.l.b16 %v1534
    %v1769 = vunpack.c.l.b16 %v1535
    %v1770 = vunpack.c.l.b16 %v1536
    %v1771 = vunpack.c.l.b16 %v1537
    %v1772 = vunpack.c.l.b16 %v1538
    %v1773 = vunpack.c.l.b16 %v1539
    %v1774 = vunpack.c.l.b16 %v1540
    %v1775 = vunpack.c.l.b16 %v1541
    %v1776 = vunpack.c.l.b16 %v1542
    %v1777 = vunpack.c.l.b16 %v1543
    %v1778 = vunpack.c.l.b16 %v1544
    %v1779 = vunpack.c.l.b16 %v1545
    %v1780 = vunpack.c.l.b16 %v1546
    %v1781 = vunpack.c.l.b16 %v1547
    %v1782 = vunpack.c.l.b16 %v1548
    %v1783 = vunpack.c.l.b16 %v1549
    %v1784 = vunpack.c.l.b16 %v1550
    %v1785 = vunpack.c.l.b16 %v1551
    %v1786 = vunpack.c.l.b16 %v1552
    %v1787 = vunpack.c.l.b16 %v1553
    %v1788 = vunpack.c.l.b16 %v1554
    %v1789 = vunpack.c.l.b16 %v1555
    %v1790 = vunpack.c.l.b16 %v1556
    %v1791 = vunpack.c.l.b16 %v1557
    %v1792 = vunpack.c.l.b16 %v1558
    %v1793 = vunpack.c.l.b16 %v1559
    %v1794 = vunpack.c.l.b16 %v1560
    %v1795 = vunpack.c.l.b16 %v1561
    %v1796 = vunpack.c.l.b16 %v1562
    %v1797 = vunpack.c.l.b16 %v1563
    %v1798 = vunpack.c.l.b16 %v1564
    %v1799 = vunpack.c.l.b16 %v1565
    %v1800 = vunpack.c.l.b16 %v1566
    %v1801 = vunpack.c.l.b16 %v1567
    %v1802 = vunpack.c.l.b16 %v1568
    %v1803 = vunpack.c.l.b16 %v1569
    %v1804 = vunpack.c.l.b16 %v1570
    %v1805 = vunpack.c.l.b16 %v1571
    %v1806 = vpack.c.b16 %v1743, %v1742
    %v1807 = vpack.c.b16 %v1745, %v1744
    %v1808 = vpack.c.b16 %v1747, %v1746
    %v1809 = vpack.c.b16 %v1749, %v1748
    %v1810 = vpack.c.b16 %v1751, %v1750
    %v1811 = vpack.c.b16 %v1753, %v1752
    %v1812 = vpack.c.b16 %v1755, %v1754
    %v1813 = vpack.c.b16 %v1757, %v1756
    %v1814 = vpack.c.b16 %v1759, %v1758
    %v1815 = vpack.c.b16 %v1761, %v1760
    %v1816 = vpack.c.b16 %v1763, %v1762
    %v1817 = vpack.c.b16 %v1765, %v1764
    %v1818 = vpack.c.b16 %v1767, %v1766
    %v1819 = vpack.c.b16 %v1769, %v1768
    %v1820 = vpack.c.b16 %v1771, %v1770
    %v1821 = vpack.c.b16 %v1773, %v1772
    %v1822 = vpack.c.b16 %v1775, %v1774
    %v1823 = vpack.c.b16 %v1777, %v1776
    %v1824 = vpack.c.b16 %v1779, %v1778
    %v1825 = vpack.c.b16 %v1781, %v1780
    %v1826 = vpack.c.b16 %v1783, %v1782
    %v1827 = vpack.c.b16 %v1785, %v1784
    %v1828 = vpack.c.b16 %v1787, %v1786
    %v1829 = vpack.c.b16 %v1789, %v1788
    %v1830 = vpack.c.b16 %v1791, %v1790
    %v1831 = vpack.c.b16 %v1793, %v1792
    %v1832 = vpack.c.b16 %v1795, %v1794
    %v1833 = vpack.c.b16 %v1797, %v1796
    %v1834 = vpack.c.b16 %v1799, %v1798
    %v1835 = vpack.c.b16 %v1801, %v1800
    %v1836 = vpack.c.b16 %v1803, %v1802
    %v1837 = vpack.c.b16 %v1805, %v1804
    %1870 = vmatprep.subr.bf16.mxu0 0
    %1871 = vmatpush1.bf16.msra.mxu0 %v1806
    %1872 = vmatprep.subr.bf16.mxu0 0
    %1873 = vmatpush1.bf16.msra.mxu0 %v1807
    %1874 = vmatprep.subr.bf16.mxu0 0
    %1875 = vmatpush1.bf16.msra.mxu0 %v1808
    %1876 = vmatprep.subr.bf16.mxu0 0
    %1877 = vmatpush1.bf16.msra.mxu0 %v1809
    %1878 = vmatprep.subr.bf16.mxu0 0
    %1879 = vmatpush1.bf16.msra.mxu0 %v1810
    %1880 = vmatprep.subr.bf16.mxu0 0
    %1881 = vmatpush1.bf16.msra.mxu0 %v1811
    %1882 = vmatprep.subr.bf16.mxu0 0
    %1883 = vmatpush1.bf16.msra.mxu0 %v1812
    %1884 = vmatprep.subr.bf16.mxu0 0
    %1885 = vmatpush1.bf16.msra.mxu0 %v1813
    %1886 = vmatprep.subr.bf16.mxu0 0
    %1887 = vmatpush1.bf16.msra.mxu0 %v1814
    %1888 = vmatprep.subr.bf16.mxu0 0
    %1889 = vmatpush1.bf16.msra.mxu0 %v1815
    %1890 = vmatprep.subr.bf16.mxu0 0
    %1891 = vmatpush1.bf16.msra.mxu0 %v1816
    %1892 = vmatprep.subr.bf16.mxu0 0
    %1893 = vmatpush1.bf16.msra.mxu0 %v1817
    %1894 = vmatprep.subr.bf16.mxu0 0
    %1895 = vmatpush1.bf16.msra.mxu0 %v1818
    %1896 = vmatprep.subr.bf16.mxu0 0
    %1897 = vmatpush1.bf16.msra.mxu0 %v1819
    %1898 = vmatprep.subr.bf16.mxu0 0
    %1899 = vmatpush1.bf16.msra.mxu0 %v1820
    %1900 = vmatprep.subr.bf16.mxu0 0
    %1901 = vmatpush1.bf16.msra.mxu0 %v1821
    %1902 = vmatprep.mubr.bf16.mxu0 %v1505
    %1903 = vmatmul.mubr.bf16.gmra.mrb[0].mxu0 %v1504
    %v1904 = vpop.f32.mrb[0].mxu0
    %v1905 = vadd.f32 %v1672, %v1904
    %v1906 = vpop.f32.mrb[0].mxu0
    %v1907 = vpop.f32.mrb[0].mxu0
    %v1908 = vadd.f32 %v1675, %v1907
    %v1909 = vpop.f32.mrb[0].mxu0
    %1910 = vdwg.mxu0
    %1911 = vmatprep.subr.bf16.mxu0 0
    %1912 = vmatpush1.bf16.msra.mxu0 %v1822
    %1913 = vmatprep.subr.bf16.mxu0 0
    %1914 = vmatpush1.bf16.msra.mxu0 %v1823
    %1915 = vmatprep.subr.bf16.mxu0 0
    %1916 = vmatpush1.bf16.msra.mxu0 %v1824
    %1917 = vmatprep.subr.bf16.mxu0 0
    %1918 = vmatpush1.bf16.msra.mxu0 %v1825
    %1919 = vmatprep.subr.bf16.mxu0 0
    %1920 = vmatpush1.bf16.msra.mxu0 %v1826
    %1921 = vmatprep.subr.bf16.mxu0 0
    %1922 = vmatpush1.bf16.msra.mxu0 %v1827
    %1923 = vmatprep.subr.bf16.mxu0 0
    %1924 = vmatpush1.bf16.msra.mxu0 %v1828
    %1925 = vmatprep.subr.bf16.mxu0 0
    %1926 = vmatpush1.bf16.msra.mxu0 %v1829
    %1927 = vmatprep.subr.bf16.mxu0 0
    %1928 = vmatpush1.bf16.msra.mxu0 %v1830
    %1929 = vmatprep.subr.bf16.mxu0 0
    %1930 = vmatpush1.bf16.msra.mxu0 %v1831
    %1931 = vmatprep.subr.bf16.mxu0 0
    %1932 = vmatpush1.bf16.msra.mxu0 %v1832
    %1933 = vmatprep.subr.bf16.mxu0 0
    %1934 = vmatpush1.bf16.msra.mxu0 %v1833
    %1935 = vmatprep.subr.bf16.mxu0 0
    %1936 = vmatpush1.bf16.msra.mxu0 %v1834
    %1937 = vmatprep.subr.bf16.mxu0 0
    %1938 = vmatpush1.bf16.msra.mxu0 %v1835
    %1939 = vmatprep.subr.bf16.mxu0 0
    %1940 = vmatpush1.bf16.msra.mxu0 %v1836
    %1941 = vmatprep.subr.bf16.mxu0 0
    %1942 = vmatpush1.bf16.msra.mxu0 %v1837
    %1943 = vmatprep.mubr.bf16.mxu0 %v1507
    %1944 = vmatmul.mubr.bf16.gmra.mrb[0].mxu0 %v1506
    %v1945 = vpop.f32.mrb[0].mxu0
    %v1946 = vadd.f32 %v1905, %v1945
    %v1947 = vpop.f32.mrb[0].mxu0
    %v1948 = vpop.f32.mrb[0].mxu0
    %v1949 = vadd.f32 %v1908, %v1948
    %v1950 = vpop.f32.mrb[0].mxu0
    %1951 = vdwg.mxu0
    %v1952 = vlaneseq
    %v1953 = vshrl.u32 %v1952, 7
    %v1954 = vsub.s32 5, %v1953
    %v1955 = vrot.slane %v127, %v1954
    %v1956 = vadd.f32 %v1946, %v1955
    %v1957 = vadd.f32 %v1949, %v1955
    %1958 = vmax.xlane.f32.xlu0 %v1956
    %v1959 = vpop.xlane.xlu0 %1958
    %1960 = vmax.xlane.f32.xlu0 %v1957
    %v1961 = vpop.xlane.xlu0 %1960
    %v1962 = vsub.f32 %v1956, %v1959
    %v1963 = vsub.f32 %v1957, %v1961
    %v1964 = vmul.f32 %v1962, 1.442695
    %v1965 = vpow.pop %v1964
    %v1966 = vmul.f32 %v1963, 1.442695
    %v1967 = vpow.pop %v1966
    %1968 = vadd.xlane.f32.xlu0 %v1965
    %v1969 = vpop.xlane.xlu0 %1968
    %1970 = vadd.xlane.f32.xlu0 %v1967
    %v1971 = vpop.xlane.xlu0 %1970
    %v1972 = vlog2.pop %v1969
    %v1973 = vmul.f32 %v1972, 0.6931472
    %v1974 = vlog2.pop %v1971
    %v1975 = vmul.f32 %v1974, 0.6931472
    %v1976 = vsub.f32 %v1962, %v1973
    %v1977 = vsub.f32 %v1963, %v1975
    %1978 = vst [vmem:[#allocation14] sm:$0xff] %v1976
    %1979 = vst [vmem:[#allocation14 + $0x8] sm:$0xff] %v1977
    // Predicated region
    $region66: #{tpu_custom_call.1} parent=1 // pred_check
      _
    $region67: #{tpu_custom_call.1} parent=1 // pred_check_branch
      %1981 = sbr.rel (0) target = $region69
    $region68: #{tpu_custom_call.1} parent=1 // pred_region
      %s1983 = ssub.s32 256, 256
      %1984 = vsyncadd [#allocation4], %s1983
      %s1985 = sshll.u32 [#allocation14], 4
      %s1986 = int_to_ptr.vmem [resolvable:$true] %s1985
      %1991 = dma.vmem_to_hbm [thread:$0]  %s1986, 256, %s9, [#allocation4], 128, 128, 8
    $region69: #{tpu_custom_call.1} parent=1 // pred_fallthru
      _
    // Predicated region
    $region70: #{tpu_custom_call.1} parent=1 // pred_check
      _
    $region71: #{tpu_custom_call.1} parent=1 // pred_check_branch
      %1993 = sbr.rel (0) target = $region73
    $region72: #{tpu_custom_call.1} parent=1 // pred_region
      %1994 = dma.done [#allocation4], 256
    $region73: #{tpu_custom_call.1} parent=1 // pred_fallthru
      _
    %1995 = vsyncpa [#allocation3], 1
    %1996 = vsyncpa [#allocation6], 1
    %1997 = vsyncpa [#allocation9], 1
    %1998 = vsyncpa [#allocation12], 1
    %1999 = vsyncpa [#allocation4], 1

</llo_original>
